<compile_context>
chip_gen: v5e
topology: v5e:2x2
jax: 0.10.0
libtpu: 0.0.40
codegen_flags: <defaults>
</compile_context>

<pallas_src>
import functools
import math

import jax
import jax.numpy as jnp
from jax.experimental import pallas as pl
from jax.experimental.pallas import tpu as pltpu


def _attention_kernel(x_ref, wqkv_ref, bqkv_ref, wproj_ref, bproj_ref, o_ref,
                      *, num_heads, scale):
    """One batch element per grid step; all heads handled inside the kernel."""
    N = x_ref.shape[1]
    A = wqkv_ref.shape[1] // 3          # all_head_dim
    H = num_heads
    D = A // H
    cdt = x_ref.dtype                   # MXU operand dtype (f32 or bf16)

    x = x_ref[0]                                              # (N, C)

    # ---- Fused QKV projection: ONE lane-dense (N, C) @ (C, 3A) matmul. ----
    qkv = jnp.dot(x, wqkv_ref[...], preferred_element_type=jnp.float32)
    qkv = qkv + bqkv_ref[...]                                 # (N, 3A) f32

    # Per-head views, heads leading so score/PV einsums are batched dots.
    q = (qkv[:, :A] * scale).astype(cdt).reshape(N, H, D).transpose(1, 0, 2)
    k = qkv[:, A:2 * A].astype(cdt).reshape(N, H, D).transpose(1, 0, 2)
    v = qkv[:, 2 * A:].astype(cdt).reshape(N, H, D).transpose(1, 0, 2)

    # ---- Scores + softmax (normalization deferred to EUP reciprocal). ----
    s = jnp.einsum('hqd,hkd->hqk', q, k,
                   preferred_element_type=jnp.float32)        # (H, N, N)
    s = s - jnp.max(s, axis=-1, keepdims=True)
    p = jnp.exp(s)                                            # un-normalized
    l = jnp.sum(p, axis=-1, keepdims=True)                    # (H, N, 1)
    # attn_drop(p=0.0) -> identity

    o = jnp.einsum('hqk,hkd->hqd', p.astype(cdt), v,
                   preferred_element_type=jnp.float32)        # (H, N, D)
    o = o * pl.reciprocal(l, approx=True)                     # deferred softmax div

    # Lane-dense (N, H*D) working layout for the fused output projection.
    o_flat = o.transpose(1, 0, 2).reshape(N, A).astype(cdt)

    # ---- Single fused output projection: (N, A) @ (A, C). ----
    out = jnp.dot(o_flat, wproj_ref[...], preferred_element_type=jnp.float32)
    # proj_drop(p=0.0) -> identity
    o_ref[0] = (out + bproj_ref[...]).astype(o_ref.dtype)


def attention_pallas(x, w_qkv, q_bias, v_bias, w_proj, b_proj, *,
                     num_heads, qk_scale=None, mask=None):
    """Forward of the PyTorch `Attention` module.

    x:      (B, N, C)
    w_qkv:  (3*all_head_dim, C)   nn.Linear weight (bias handled separately)
    q_bias: (all_head_dim,) or None     (qkv_bias=False -> None)
    v_bias: (all_head_dim,) or None
    w_proj: (C, all_head_dim)
    b_proj: (C,)
    """
    if mask is not None:
        # TODO(synk): windowed-mask branch (attn + mask, reshaped over nW).
        raise NotImplementedError("mask is not None path not implemented")

    B, N, C = x.shape
    A = w_qkv.shape[0] // 3            # all_head_dim
    H = num_heads
    D = A // H
    scale = qk_scale if qk_scale is not None else D ** (-0.5)

    # NOTE: in production these transposes are done ONCE at model init
    # (weights stored pre-transposed as (C, 3A) / (A, C)); kept here only so
    # the wrapper accepts native PyTorch (out, in) layouts.
    wqkv_t = w_qkv.T                   # (C, 3A)
    wproj_t = w_proj.T                 # (A, C)

    if q_bias is not None:
        b_qkv = jnp.concatenate([q_bias, jnp.zeros_like(v_bias), v_bias])
    else:
        b_qkv = jnp.zeros((3 * A,), x.dtype)
    b_qkv = b_qkv.astype(jnp.float32).reshape(1, 3 * A)
    bproj = b_proj.astype(jnp.float32).reshape(1, C)

    kernel = functools.partial(_attention_kernel, num_heads=H, scale=scale)

    itemsize = x.dtype.itemsize
    flops = 2 * B * (N * C * 3 * A + 2 * H * N * N * D + N * A * C)
    transcendentals = B * H * N * N                       # exp
    bytes_accessed = (B * N * C * itemsize                # x
                      + C * 3 * A * itemsize              # w_qkv
                      + 3 * A * 4                         # qkv bias
                      + A * C * itemsize                  # w_proj
                      + C * 4                             # proj bias
                      + B * N * C * itemsize)             # output

    out = pl.pallas_call(
        kernel,
        out_shape=jax.ShapeDtypeStruct((B, N, C), x.dtype),
        grid_spec=pltpu.PrefetchScalarGridSpec(
            num_scalar_prefetch=0,
            grid=(B,),                                     # batch only
            in_specs=[
                pl.BlockSpec((1, N, C), lambda b: (b, 0, 0)),    # x[b]
                pl.BlockSpec((C, 3 * A), lambda b: (0, 0)),      # w_qkv^T (resident)
                pl.BlockSpec((1, 3 * A), lambda b: (0, 0)),      # qkv bias
                pl.BlockSpec((A, C), lambda b: (0, 0)),          # w_proj^T (resident)
                pl.BlockSpec((1, C), lambda b: (0, 0)),          # proj bias
            ],
            out_specs=pl.BlockSpec((1, N, C), lambda b: (b, 0, 0)),
        ),
        compiler_params=pltpu.CompilerParams(
            dimension_semantics=("parallel",),             # B>=2 -> both v7x TCs
        ),
        cost_estimate=pl.CostEstimate(
            flops=flops,
            transcendentals=transcendentals,
            bytes_accessed=bytes_accessed,
        ),
    )(x, wqkv_t, b_qkv, wproj_t, bproj)

    return out


def _reference_attention(x, w_qkv, q_bias, v_bias, w_proj, b_proj,
                         num_heads, scale):
    B, N, C = x.shape
    all_head_dim = w_qkv.shape[0] // 3
    D = all_head_dim // num_heads
    qkv = x @ w_qkv.T
    if q_bias is not None:
        qkv_b = jnp.concatenate([q_bias, jnp.zeros_like(v_bias), v_bias])
        qkv = qkv + qkv_b
    qkv = qkv.reshape(B, N, 3, num_heads, D).transpose(2, 0, 3, 1, 4)
    q, k, v = qkv[0], qkv[1], qkv[2]
    q = q * scale
    attn = q @ jnp.swapaxes(k, -2, -1)
    attn = jax.nn.softmax(attn, axis=-1)
    out = (attn @ v).transpose(0, 2, 1, 3).reshape(B, N, all_head_dim)
    return out @ w_proj.T + b_proj


if __name__ == "__main__":
    key = jax.random.PRNGKey(0)
    kx, kqkv, kqb, kvb, kpw, kpb = jax.random.split(key, 6)

    B, N, dim = 2, 16, 128
    num_heads = 8
    head_dim = dim // num_heads
    all_head_dim = head_dim * num_heads
    scale = head_dim ** (-0.5)

    x = jax.random.normal(kx, (B, N, dim), jnp.float32)

    bound_qkv = 1.0 / math.sqrt(dim)
    w_qkv = jax.random.uniform(kqkv, (3 * all_head_dim, dim), jnp.float32,
                               -bound_qkv, bound_qkv)
    # qkv_bias=True path (non-zero to exercise the bias handling)
    q_bias = 0.05 * jax.random.normal(kqb, (all_head_dim,), jnp.float32)
    v_bias = 0.05 * jax.random.normal(kvb, (all_head_dim,), jnp.float32)

    bound_p = 1.0 / math.sqrt(all_head_dim)
    w_proj = jax.random.uniform(kpw, (dim, all_head_dim), jnp.float32,
                                -bound_p, bound_p)
    b_proj = jax.random.uniform(kpb, (dim,), jnp.float32, -bound_p, bound_p)

    out = attention_pallas(x, w_qkv, q_bias, v_bias, w_proj, b_proj,
                           num_heads=num_heads)
    out = jax.block_until_ready(out)

    ref = _reference_attention(x, w_qkv, q_bias, v_bias, w_proj, b_proj,
                               num_heads, scale)
    assert out.shape == (B, N, dim)
    assert jnp.allclose(out, ref, atol=1e-2, rtol=1e-2), (
        float(jnp.max(jnp.abs(out - ref))))

    print("KERNEL_OK")
</pallas_src>

<mosaic_0001>
module attributes {stable_mosaic.version = 11 : i64} {
  func.func @_attention_kernel(%arg0: i32, %arg1: memref<1x16x128xf32, #tpu.memory_space<vmem>>, %arg2: memref<128x384xf32, #tpu.memory_space<vmem>>, %arg3: memref<1x384xf32, #tpu.memory_space<vmem>>, %arg4: memref<128x128xf32, #tpu.memory_space<vmem>>, %arg5: memref<1x128xf32, #tpu.memory_space<vmem>>, %arg6: memref<1x16x128xf32, #tpu.memory_space<vmem>>) attributes {dimension_semantics = [#tpu.dimension_semantics<parallel>], iteration_bounds = array<i64: 2>, scalar_prefetch = 0 : i64, scratch_operands = 0 : i64, tpu.core_type = #tpu.core_type<tc>, window_params = [{transform_indices = @transform_0, window_bounds = array<i64: 1, 16, 128>}, {pipeline_mode = #tpu.pipeline_mode<synchronous>, transform_indices = @transform_1, window_bounds = array<i64: 128, 384>}, {pipeline_mode = #tpu.pipeline_mode<synchronous>, transform_indices = @transform_2, window_bounds = array<i64: 1, 384>}, {pipeline_mode = #tpu.pipeline_mode<synchronous>, transform_indices = @transform_3, window_bounds = array<i64: 128, 128>}, {pipeline_mode = #tpu.pipeline_mode<synchronous>, transform_indices = @transform_4, window_bounds = array<i64: 1, 128>}, {transform_indices = @transform_5, window_bounds = array<i64: 1, 16, 128>}]} {
    %c0 = arith.constant 0 : index
    %c0_0 = arith.constant 0 : index
    %c0_1 = arith.constant 0 : index
    %0 = vector.load %arg1[%c0, %c0_0, %c0_1] : memref<1x16x128xf32, #tpu.memory_space<vmem>>, vector<1x16x128xf32>
    %1 = vector.shape_cast %0 : vector<1x16x128xf32> to vector<16x128xf32>
    %c0_2 = arith.constant 0 : index
    %c0_3 = arith.constant 0 : index
    %2 = vector.load %arg2[%c0_2, %c0_3] : memref<128x384xf32, #tpu.memory_space<vmem>>, vector<128x384xf32>
    %cst = arith.constant dense<0.000000e+00> : vector<16x384xf32>
    %3 = tpu.matmul %1, %2, %cst {dimension_numbers = #tpu.dot_dimension_numbers<[1], [0], [0], [1], [0, 0, 1, 1], [], []>} : vector<16x128xf32>, vector<128x384xf32>, vector<16x384xf32> -> vector<16x384xf32>
    %c0_4 = arith.constant 0 : index
    %c0_5 = arith.constant 0 : index
    %4 = vector.load %arg3[%c0_4, %c0_5] : memref<1x384xf32, #tpu.memory_space<vmem>>, vector<1x384xf32>
    %5 = vector.broadcast %4 : vector<1x384xf32> to vector<16x384xf32>
    %6 = arith.addf %3, %5 : vector<16x384xf32>
    %7 = vector.extract_strided_slice %6 {offsets = [0, 0], sizes = [16, 128], strides = [1, 1]} : vector<16x384xf32> to vector<16x128xf32>
    %cst_6 = arith.constant 2.500000e-01 : f32
    %8 = vector.broadcast %cst_6 : f32 to vector<16x128xf32>
    %9 = arith.mulf %7, %8 : vector<16x128xf32>
    %10 = vector.shape_cast %9 : vector<16x128xf32> to vector<16x8x16xf32>
    %11 = tpu.transpose %10, [1, 0, 2] : vector<16x8x16xf32> -> vector<8x16x16xf32>
    %12 = vector.extract_strided_slice %6 {offsets = [0, 128], sizes = [16, 128], strides = [1, 1]} : vector<16x384xf32> to vector<16x128xf32>
    %13 = vector.shape_cast %12 : vector<16x128xf32> to vector<16x8x16xf32>
    %14 = tpu.transpose %13, [1, 0, 2] : vector<16x8x16xf32> -> vector<8x16x16xf32>
    %15 = vector.extract_strided_slice %6 {offsets = [0, 256], sizes = [16, 128], strides = [1, 1]} : vector<16x384xf32> to vector<16x128xf32>
    %16 = vector.shape_cast %15 : vector<16x128xf32> to vector<16x8x16xf32>
    %17 = tpu.transpose %16, [1, 0, 2] : vector<16x8x16xf32> -> vector<8x16x16xf32>
    "tpu.trace_start"() <{level = 10 : i32, message = "hqd,hkd->hqk"}> : () -> ()
    %cst_7 = arith.constant dense<0.000000e+00> : vector<8x16x16xf32>
    %18 = tpu.matmul %11, %14, %cst_7 {dimension_numbers = #tpu.dot_dimension_numbers<[2], [2], [1], [1], [0, 0, 0, 1, 1, 1], [0], [0]>} : vector<8x16x16xf32>, vector<8x16x16xf32>, vector<8x16x16xf32> -> vector<8x16x16xf32>
    "tpu.trace_stop"() : () -> ()
    %cst_8 = arith.constant dense<0xFF800000> : vector<8x16xf32>
    %19 = vector.multi_reduction <maximumf>, %18, %cst_8 [2] : vector<8x16x16xf32> to vector<8x16xf32>
    %20 = vector.shape_cast %19 : vector<8x16xf32> to vector<8x16x1xf32>
    %21 = vector.broadcast %20 : vector<8x16x1xf32> to vector<8x16x16xf32>
    %22 = arith.subf %18, %21 : vector<8x16x16xf32>
    %23 = math.exp %22 : vector<8x16x16xf32>
    %cst_9 = arith.constant dense<0.000000e+00> : vector<8x16xf32>
    %24 = vector.multi_reduction <add>, %23, %cst_9 [2] : vector<8x16x16xf32> to vector<8x16xf32>
    %25 = vector.shape_cast %24 : vector<8x16xf32> to vector<8x16x1xf32>
    "tpu.trace_start"() <{level = 10 : i32, message = "hqk,hkd->hqd"}> : () -> ()
    %cst_10 = arith.constant dense<0.000000e+00> : vector<8x16x16xf32>
    %26 = tpu.matmul %23, %17, %cst_10 {dimension_numbers = #tpu.dot_dimension_numbers<[2], [1], [1], [2], [0, 0, 0, 1, 1, 2], [0], [0]>} : vector<8x16x16xf32>, vector<8x16x16xf32>, vector<8x16x16xf32> -> vector<8x16x16xf32>
    "tpu.trace_stop"() : () -> ()
    %27 = tpu.reciprocal %25 {approx = true} : vector<8x16x1xf32> -> vector<8x16x1xf32>
    %28 = vector.broadcast %27 : vector<8x16x1xf32> to vector<8x16x16xf32>
    %29 = arith.mulf %26, %28 : vector<8x16x16xf32>
    %30 = tpu.transpose %29, [1, 0, 2] : vector<8x16x16xf32> -> vector<16x8x16xf32>
    %31 = vector.shape_cast %30 : vector<16x8x16xf32> to vector<16x128xf32>
    %c0_11 = arith.constant 0 : index
    %c0_12 = arith.constant 0 : index
    %32 = vector.load %arg4[%c0_11, %c0_12] : memref<128x128xf32, #tpu.memory_space<vmem>>, vector<128x128xf32>
    %cst_13 = arith.constant dense<0.000000e+00> : vector<16x128xf32>
    %33 = tpu.matmul %31, %32, %cst_13 {dimension_numbers = #tpu.dot_dimension_numbers<[1], [0], [0], [1], [0, 0, 1, 1], [], []>} : vector<16x128xf32>, vector<128x128xf32>, vector<16x128xf32> -> vector<16x128xf32>
    %c0_14 = arith.constant 0 : index
    %c0_15 = arith.constant 0 : index
    %34 = vector.load %arg5[%c0_14, %c0_15] : memref<1x128xf32, #tpu.memory_space<vmem>>, vector<1x128xf32>
    %35 = vector.broadcast %34 : vector<1x128xf32> to vector<16x128xf32>
    %36 = arith.addf %33, %35 : vector<16x128xf32>
    %c0_16 = arith.constant 0 : index
    %c0_17 = arith.constant 0 : index
    %c0_18 = arith.constant 0 : index
    %37 = vector.load %arg6[%c0_16, %c0_17, %c0_18] : memref<1x16x128xf32, #tpu.memory_space<vmem>>, vector<1x16x128xf32>
    %38 = vector.shape_cast %37 : vector<1x16x128xf32> to vector<16x128xf32>
    %39 = vector.shape_cast %36 : vector<16x128xf32> to vector<1x16x128xf32>
    tpu.vector_store %arg6[%c0_16, %c0_17, %c0_18], %39 {strides = array<i32>} : memref<1x16x128xf32, #tpu.memory_space<vmem>>, vector<1x16x128xf32>,
    return
  }
  func.func @transform_0(%arg0: i32) -> (i32, i32, i32) {
    %c0_i32 = arith.constant 0 : i32
    %c0_i32_0 = arith.constant 0 : i32
    %c0_i32_1 = arith.constant 0 : i32
    return %arg0, %c0_i32, %c0_i32_0 : i32, i32, i32
  }
  func.func @transform_1(%arg0: i32) -> (i32, i32) {
    %c0_i32 = arith.constant 0 : i32
    %c0_i32_0 = arith.constant 0 : i32
    %c0_i32_1 = arith.constant 0 : i32
    return %c0_i32, %c0_i32_0 : i32, i32
  }
  func.func @transform_2(%arg0: i32) -> (i32, i32) {
    %c0_i32 = arith.constant 0 : i32
    %c0_i32_0 = arith.constant 0 : i32
    %c0_i32_1 = arith.constant 0 : i32
    return %c0_i32, %c0_i32_0 : i32, i32
  }
  func.func @transform_3(%arg0: i32) -> (i32, i32) {
    %c0_i32 = arith.constant 0 : i32
    %c0_i32_0 = arith.constant 0 : i32
    %c0_i32_1 = arith.constant 0 : i32
    return %c0_i32, %c0_i32_0 : i32, i32
  }
  func.func @transform_4(%arg0: i32) -> (i32, i32) {
    %c0_i32 = arith.constant 0 : i32
    %c0_i32_0 = arith.constant 0 : i32
    %c0_i32_1 = arith.constant 0 : i32
    return %c0_i32, %c0_i32_0 : i32, i32
  }
  func.func @transform_5(%arg0: i32) -> (i32, i32, i32) {
    %c0_i32 = arith.constant 0 : i32
    %c0_i32_0 = arith.constant 0 : i32
    %c0_i32_1 = arith.constant 0 : i32
    return %arg0, %c0_i32, %c0_i32_0 : i32, i32, i32
  }
}

</mosaic_0001>

<llo_original>
// kernel: tpu_custom_call.1
$region0: #{tpu_custom_call.1}
  #allocation0 [shape = 'u32[]', space=smem, size = 0x4, offset = 0x4, fixed_abs, tag = 'smem constant byte address 0x4 - core index']
  #allocation1 [shape = 'u32[72,128]{1,0:T(1,128)}', space=vmem, size = 0x9000, scoped, tag = 'internal scratch']
  %s0 = inlined_call_operand.hbm [shape: f32[2,16,128], index: 0, kind: input, shape index: {}]
  %s1 = inlined_call_operand.hbm [shape: f32[128,384], index: 1, kind: input, shape index: {}]
  %s2 = inlined_call_operand.hbm [shape: f32[1,384], index: 2, kind: input, shape index: {}]
  %s3 = inlined_call_operand.hbm [shape: f32[128,128], index: 3, kind: input, shape index: {}]
  %s4 = inlined_call_operand.vmem [shape: f32[1,128], index: 4, kind: input, shape index: {}]
  %s5 = inlined_call_operand.hbm [shape: f32[2,16,128], index: 5, kind: output, shape index: {}]
  %s6 = sld [smem:[#allocation0]]
  $region69: #{tpu_custom_call.1} parent=0
    _
  %s8 = ssub.s32 1, %s6
  %s9 = scalar_select 0, %s8, %s6
  $region1: #{tpu_custom_call.1} parent=0
    #allocation2 [shape = 'u8[16384]{0}', space=vmem, size = 0x4000, scoped, tag = 'input window, operand 0']
    #allocation3 [shape = 's32[2]{0}', space=sflag, size = 0x8, scoped, tag = 'scoped memory for tpu_custom_call.1']
    #allocation4 [shape = 's32[2]{0}', space=sflag, size = 0x8, scoped, tag = 'scoped memory for tpu_custom_call.1']
    #allocation5 [shape = 'u8[196608]{0}', space=vmem, size = 0x30000, scoped, tag = 'input window, operand 1, single buffered']
    #allocation6 [shape = 's32[1]{0}', space=sflag, size = 0x4, scoped, tag = 'scoped memory for tpu_custom_call.1']
    #allocation7 [shape = 'u8[1536]{0}', space=vmem, size = 0x800, scoped, tag = 'input window, operand 2, single buffered']
    #allocation8 [shape = 'u8[65536]{0}', space=vmem, size = 0x10000, scoped, tag = 'input window, operand 3, single buffered']
    #allocation9 [shape = 's32[1]{0}', space=sflag, size = 0x4, scoped, tag = 'scoped memory for tpu_custom_call.1']
    #allocation10 [shape = 'u8[16384]{0}', space=vmem, size = 0x4000, scoped, tag = 'output window, operand 0']
    %10 = vsyncpa [#allocation3], 0
    %s11 = scalar_lea.sflag [#allocation3], 1
    %12 = vsyncpa %s11, 0
    %13 = vsyncpa [#allocation6], 0
    %14 = vsyncpa [#allocation9], 0
    %15 = vsyncpa [#allocation4], 0
    %s16 = scalar_lea.sflag [#allocation4], 1
    %17 = vsyncpa %s16, 0
    loop: start=0, step=1, limit=4
    $region2: #{tpu_custom_call.1} parent=1 // loop_pre_header
      _
    $region3: #{tpu_custom_call.1} parent=1 // loop_header
      %s19 = sphi 0, %s23
      %p20 = scmp.ge.s32.totalorder %s19, 4
      %s29 = sphi 0, %s31
      %s32 = sphi 0, %s29
      %s33 = sphi 0, %s32
      %s49 = sphi 0, %s33
      %s53 = sphi 0, %s53
      %s55 = sphi 0, %s53
      %s56 = sphi 0, %s55
      %s70 = sphi 0, %s56
      %s74 = sphi 0, %s74
      %s76 = sphi 0, %s74
      %s77 = sphi 0, %s76
      %s91 = sphi 0, %s77
      %s95 = sphi 0, %s95
      %s97 = sphi 0, %s95
      %s98 = sphi 0, %s97
      %s112 = sphi 0, %s98
      %s116 = sphi 0, %s116
      %s118 = sphi 0, %s116
      %s119 = sphi 0, %s118
      %s133 = sphi 0, %s119
      %s139 = sphi 0, %s141
      %s142 = sphi 0, %s139
      %s143 = sphi 0, %s142
      %s159 = sphi 0, %s143
    $region4: #{tpu_custom_call.1} parent=1 // loop_header_branch
      %22 = sbr.rel (%p20) target = $region8
    $region5: #{tpu_custom_call.1} parent=1 // loop_body
      %s24 = ssub.s32 %s19, 1
      %s25 = ssub.s32 %s19, 2
      %s26 = sadd.s32 %s19, 1
      %s27 = ssub.s32 %s19, %s26
      %p28 = scmp.eq.s32.totalorder %s27, 0
      %s30 = sadd.s32 %s29, 1
      %s31 = scalar_select %p28, %s29, %s30
      %p34 = pneg %p28
      %p35 = scmp.eq.s32.totalorder %s19, 1
      %p36 = por %p34, %p35
      %p37 = scmp.ne.s32.totalorder %s29, %s32
      %p38 = scmp.eq.s32.totalorder %s19, 0
      %p39 = por %p37, %p38
      %p40 = scmp.ne.s32.totalorder %s29, %s32
      %p41 = scmp.eq.s32.totalorder %s24, 1
      %p42 = por %p40, %p41
      %p43 = scmp.ne.s32.totalorder %s32, %s33
      %p44 = scmp.eq.s32.totalorder %s24, 0
      %p45 = por %p43, %p44
      %p46 = scmp.ne.s32.totalorder %s32, %s33
      %p47 = scmp.eq.s32.totalorder %s25, 1
      %p48 = por %p46, %p47
      %p50 = scmp.ne.s32.totalorder %s33, %s49
      %p51 = scmp.eq.s32.totalorder %s25, 0
      %p52 = por %p50, %p51
      %s54 = sadd.s32 %s53, 1
      %p57 = scmp.eq.s32.totalorder %s19, 1
      %p58 = scmp.ne.s32.totalorder %s53, %s55
      %p59 = scmp.eq.s32.totalorder %s19, 0
      %p60 = por %p58, %p59
      %p61 = scmp.ne.s32.totalorder %s53, %s55
      %p62 = scmp.eq.s32.totalorder %s24, 1
      %p63 = por %p61, %p62
      %p64 = scmp.ne.s32.totalorder %s55, %s56
      %p65 = scmp.eq.s32.totalorder %s24, 0
      %p66 = por %p64, %p65
      %p67 = scmp.ne.s32.totalorder %s55, %s56
      %p68 = scmp.eq.s32.totalorder %s25, 1
      %p69 = por %p67, %p68
      %p71 = scmp.ne.s32.totalorder %s56, %s70
      %p72 = scmp.eq.s32.totalorder %s25, 0
      %p73 = por %p71, %p72
      %s75 = sadd.s32 %s74, 1
      %p78 = scmp.eq.s32.totalorder %s19, 1
      %p79 = scmp.ne.s32.totalorder %s74, %s76
      %p80 = scmp.eq.s32.totalorder %s19, 0
      %p81 = por %p79, %p80
      %p82 = scmp.ne.s32.totalorder %s74, %s76
      %p83 = scmp.eq.s32.totalorder %s24, 1
      %p84 = por %p82, %p83
      %p85 = scmp.ne.s32.totalorder %s76, %s77
      %p86 = scmp.eq.s32.totalorder %s24, 0
      %p87 = por %p85, %p86
      %p88 = scmp.ne.s32.totalorder %s76, %s77
      %p89 = scmp.eq.s32.totalorder %s25, 1
      %p90 = por %p88, %p89
      %p92 = scmp.ne.s32.totalorder %s77, %s91
      %p93 = scmp.eq.s32.totalorder %s25, 0
      %p94 = por %p92, %p93
      %s96 = sadd.s32 %s95, 1
      %p99 = scmp.eq.s32.totalorder %s19, 1
      %p100 = scmp.ne.s32.totalorder %s95, %s97
      %p101 = scmp.eq.s32.totalorder %s19, 0
      %p102 = por %p100, %p101
      %p103 = scmp.ne.s32.totalorder %s95, %s97
      %p104 = scmp.eq.s32.totalorder %s24, 1
      %p105 = por %p103, %p104
      %p106 = scmp.ne.s32.totalorder %s97, %s98
      %p107 = scmp.eq.s32.totalorder %s24, 0
      %p108 = por %p106, %p107
      %p109 = scmp.ne.s32.totalorder %s97, %s98
      %p110 = scmp.eq.s32.totalorder %s25, 1
      %p111 = por %p109, %p110
      %p113 = scmp.ne.s32.totalorder %s98, %s112
      %p114 = scmp.eq.s32.totalorder %s25, 0
      %p115 = por %p113, %p114
      %s117 = sadd.s32 %s116, 1
      %p120 = scmp.eq.s32.totalorder %s19, 1
      %p121 = scmp.ne.s32.totalorder %s116, %s118
      %p122 = scmp.eq.s32.totalorder %s19, 0
      %p123 = por %p121, %p122
      %p124 = scmp.ne.s32.totalorder %s116, %s118
      %p125 = scmp.eq.s32.totalorder %s24, 1
      %p126 = por %p124, %p125
      %p127 = scmp.ne.s32.totalorder %s118, %s119
      %p128 = scmp.eq.s32.totalorder %s24, 0
      %p129 = por %p127, %p128
      %p130 = scmp.ne.s32.totalorder %s118, %s119
      %p131 = scmp.eq.s32.totalorder %s25, 1
      %p132 = por %p130, %p131
      %p134 = scmp.ne.s32.totalorder %s119, %s133
      %p135 = scmp.eq.s32.totalorder %s25, 0
      %p136 = por %p134, %p135
      %s137 = ssub.s32 %s19, %s26
      %p138 = scmp.eq.s32.totalorder %s137, 0
      %s140 = sadd.s32 %s139, 1
      %s141 = scalar_select %p138, %s139, %s140
      %p144 = pneg %p138
      %p145 = scmp.eq.s32.totalorder %s19, 1
      %p146 = por %p144, %p145
      %p147 = scmp.ne.s32.totalorder %s139, %s142
      %p148 = scmp.eq.s32.totalorder %s19, 0
      %p149 = por %p147, %p148
      %p150 = scmp.ne.s32.totalorder %s139, %s142
      %p151 = scmp.eq.s32.totalorder %s24, 1
      %p152 = por %p150, %p151
      %p153 = scmp.ne.s32.totalorder %s142, %s143
      %p154 = scmp.eq.s32.totalorder %s24, 0
      %p155 = por %p153, %p154
      %p156 = scmp.ne.s32.totalorder %s142, %s143
      %p157 = scmp.eq.s32.totalorder %s25, 1
      %p158 = por %p156, %p157
      %p160 = scmp.ne.s32.totalorder %s143, %s159
      %p161 = scmp.eq.s32.totalorder %s25, 0
      %p162 = por %p160, %p161
      %p163 = scmp.le.s32.totalorder 1, %s19
      %p164 = scmp.lt.s32.totalorder %s19, 3
      %p165 = pnand %p163, %p164
      %p166 = pneg %p165
      // Predicated region
      $region9: #{tpu_custom_call.1} parent=5 // pred_check
        _
      $region10: #{tpu_custom_call.1} parent=5 // pred_check_branch
        %168 = sbr.rel (%p165) target = $region12
      $region11: #{tpu_custom_call.1} parent=5 // pred_region
        %s169 = ssub.s32 %s19, 1
        // Predicated region
        $region13: #{tpu_custom_call.1} parent=11 // pred_check
          %p170 = pneg %p66
        $region14: #{tpu_custom_call.1} parent=11 // pred_check_branch
          %172 = sbr.rel (%p170) target = $region16
        $region15: #{tpu_custom_call.1} parent=11 // pred_region
          %174 = vsyncadd [#allocation6], 0
          %s175 = sshll.u32 %s1, 4
          %s176 = int_to_ptr.hbm [resolvable:$true] %s175
          %s177 = sshll.u32 [#allocation5], 4
          %s178 = int_to_ptr.vmem [resolvable:$true] %s177
          %183 = dma.hbm_to_vmem [thread:$0]  %s176, 6144, %s178, [#allocation6], 384, 384, 24
        $region16: #{tpu_custom_call.1} parent=11 // pred_fallthru
          _
        // Predicated region
        $region17: #{tpu_custom_call.1} parent=11 // pred_check
          %p184 = pneg %p87
        $region18: #{tpu_custom_call.1} parent=11 // pred_check_branch
          %186 = sbr.rel (%p184) target = $region20
        $region19: #{tpu_custom_call.1} parent=11 // pred_region
          %188 = vsyncadd [#allocation6], 0
          %s190 = sshll.u32 %s2, 4
          %s191 = int_to_ptr.hbm [resolvable:$true] %s190
          %s192 = sshll.u32 [#allocation7], 4
          %s193 = int_to_ptr.vmem [resolvable:$true] %s192
          %195 = dma.hbm_to_vmem [thread:$0]  %s191, 48, %s193, [#allocation6]
        $region20: #{tpu_custom_call.1} parent=11 // pred_fallthru
          _
        // Predicated region
        $region21: #{tpu_custom_call.1} parent=11 // pred_check
          %p196 = pneg %p108
        $region22: #{tpu_custom_call.1} parent=11 // pred_check_branch
          %198 = sbr.rel (%p196) target = $region24
        $region23: #{tpu_custom_call.1} parent=11 // pred_region
          %200 = vsyncadd [#allocation9], 0
          %s201 = sshll.u32 %s3, 4
          %s202 = int_to_ptr.hbm [resolvable:$true] %s201
          %s203 = sshll.u32 [#allocation8], 4
          %s204 = int_to_ptr.vmem [resolvable:$true] %s203
          %209 = dma.hbm_to_vmem [thread:$0]  %s202, 2048, %s204, [#allocation9], 128, 128, 8
        $region24: #{tpu_custom_call.1} parent=11 // pred_fallthru
          _
        // Predicated region
        $region25: #{tpu_custom_call.1} parent=11 // pred_check
          %p210 = pneg %p129
        $region26: #{tpu_custom_call.1} parent=11 // pred_check_branch
          %212 = sbr.rel (%p210) target = $region28
        $region27: #{tpu_custom_call.1} parent=11 // pred_region
          _
        $region28: #{tpu_custom_call.1} parent=11 // pred_fallthru
          _
      $region12: #{tpu_custom_call.1} parent=5 // pred_fallthru
        _
      %p213 = scmp.lt.s32.totalorder %s19, 2
      // Predicated region
      $region29: #{tpu_custom_call.1} parent=5 // pred_check
        %p214 = pneg %p213
      $region30: #{tpu_custom_call.1} parent=5 // pred_check_branch
        %216 = sbr.rel (%p214) target = $region32
      $region31: #{tpu_custom_call.1} parent=5 // pred_region
        // Predicated region
        $region33: #{tpu_custom_call.1} parent=31 // pred_check
          %p217 = pneg %p39
        $region34: #{tpu_custom_call.1} parent=31 // pred_check_branch
          %219 = sbr.rel (%p217) target = $region36
        $region35: #{tpu_custom_call.1} parent=31 // pred_region
          %s220 = sand.u32 %s29, 1
          %s221 = scalar_lea.sflag [#allocation3], %s220
          %s222 = sand.u32 %s29, 1
          %s223 = smul.addr %s222, 16
          %s224 = scalar_lea.vmem [#allocation2], %s223
          %226 = vsyncadd %s221, 0
          %s227 = smul.addr %s19, 2
          %s228 = smul.addr %s227, 8
          %s229 = scalar_lea.hbm %s0, %s228
          %s230 = sshll.u32 %s229, 4
          %s231 = int_to_ptr.hbm [resolvable:$true] %s230
          %s232 = sshll.u32 %s224, 4
          %s233 = int_to_ptr.vmem [resolvable:$true] %s232
          %238 = dma.hbm_to_vmem [thread:$0]  %s231, 256, %s233, %s221, 128, 128, 8
        $region36: #{tpu_custom_call.1} parent=31 // pred_fallthru
          _
      $region32: #{tpu_custom_call.1} parent=5 // pred_fallthru
        _
      %p239 = scmp.le.s32.totalorder 1, %s19
      %p240 = scmp.lt.s32.totalorder %s19, 3
      %p241 = pnand %p239, %p240
      %p242 = pneg %p241
      // Predicated region
      $region37: #{tpu_custom_call.1} parent=5 // pred_check
        _
      $region38: #{tpu_custom_call.1} parent=5 // pred_check_branch
        %244 = sbr.rel (%p241) target = $region40
      $region39: #{tpu_custom_call.1} parent=5 // pred_region
        %s245 = ssub.s32 %s19, 1
        %s246 = sand.u32 %s32, 1
        %s247 = scalar_lea.sflag [#allocation3], %s246
        %s248 = sand.u32 %s32, 1
        %s249 = smul.addr %s248, 16
        %s250 = scalar_lea.vmem [#allocation2], %s249
        // Predicated region
        $region41: #{tpu_custom_call.1} parent=39 // pred_check
          %p251 = pneg %p45
        $region42: #{tpu_custom_call.1} parent=39 // pred_check_branch
          %253 = sbr.rel (%p251) target = $region44
        $region43: #{tpu_custom_call.1} parent=39 // pred_region
          %255 = dma.done %s247, 256
        $region44: #{tpu_custom_call.1} parent=39 // pred_fallthru
          _
        // Predicated region
        $region45: #{tpu_custom_call.1} parent=39 // pred_check
          %p256 = pneg %p66
        $region46: #{tpu_custom_call.1} parent=39 // pred_check_branch
          %258 = sbr.rel (%p256) target = $region48
        $region47: #{tpu_custom_call.1} parent=39 // pred_region
          %260 = dma.done [#allocation6], 6144
        $region48: #{tpu_custom_call.1} parent=39 // pred_fallthru
          _
        // Predicated region
        $region49: #{tpu_custom_call.1} parent=39 // pred_check
          %p261 = pneg %p87
        $region50: #{tpu_custom_call.1} parent=39 // pred_check_branch
          %263 = sbr.rel (%p261) target = $region52
        $region51: #{tpu_custom_call.1} parent=39 // pred_region
          %265 = dma.done [#allocation6], 48
        $region52: #{tpu_custom_call.1} parent=39 // pred_fallthru
          _
        // Predicated region
        $region53: #{tpu_custom_call.1} parent=39 // pred_check
          %p266 = pneg %p108
        $region54: #{tpu_custom_call.1} parent=39 // pred_check_branch
          %268 = sbr.rel (%p266) target = $region56
        $region55: #{tpu_custom_call.1} parent=39 // pred_region
          %270 = dma.done [#allocation9], 2048
        $region56: #{tpu_custom_call.1} parent=39 // pred_fallthru
          _
        %s271 = sand.u32 %s32, 1
        %s272 = scalar_lea.sflag [#allocation3], %s271
        %s273 = sand.u32 %s32, 1
        %s274 = smul.addr %s273, 16
        %s275 = scalar_lea.vmem [#allocation2], %s274
        %p276 = pneg %p45
        %p277 = pneg %p42
        %p278 = pneg %p66
        %p279 = pneg %p63
        %p280 = pneg %p87
        %p281 = pneg %p84
        %p282 = pneg %p108
        %p283 = pneg %p105
        %p284 = pneg %p129
        %p285 = pneg %p126
        %p286 = pneg %p155
        %p287 = pneg %p152
        %s288 = sand.u32 %s142, 1
        %s289 = scalar_lea.sflag [#allocation4], %s288
        %s290 = sand.u32 %s142, 1
        %s291 = smul.addr %s290, 16
        %s292 = scalar_lea.vmem [#allocation10], %s291
        %v293 = vld [vmem:[%s250] sm:$0xff]
        %v294 = vld [vmem:[%s250 + $0x8] sm:$0xff]
        %v295 = vld [vmem:[#allocation5] sm:$0xff]
        %v296 = vld [vmem:[#allocation5 + $0x8] sm:$0xff]
        %v297 = vld [vmem:[#allocation5 + $0x10] sm:$0xff]
        %v298 = vld [vmem:[#allocation5 + $0x18] sm:$0xff]
        %v299 = vld [vmem:[#allocation5 + $0x20] sm:$0xff]
        %v300 = vld [vmem:[#allocation5 + $0x28] sm:$0xff]
        %v301 = vld [vmem:[#allocation5 + $0x30] sm:$0xff]
        %v302 = vld [vmem:[#allocation5 + $0x38] sm:$0xff]
        %v303 = vld [vmem:[#allocation5 + $0x40] sm:$0xff]
        %v304 = vld [vmem:[#allocation5 + $0x48] sm:$0xff]
        %v305 = vld [vmem:[#allocation5 + $0x50] sm:$0xff]
        %v306 = vld [vmem:[#allocation5 + $0x58] sm:$0xff]
        %v307 = vld [vmem:[#allocation5 + $0x60] sm:$0xff]
        %v308 = vld [vmem:[#allocation5 + $0x68] sm:$0xff]
        %v309 = vld [vmem:[#allocation5 + $0x70] sm:$0xff]
        %v310 = vld [vmem:[#allocation5 + $0x78] sm:$0xff]
        %v311 = vld [vmem:[#allocation5 + $0x80] sm:$0xff]
        %v312 = vld [vmem:[#allocation5 + $0x88] sm:$0xff]
        %v313 = vld [vmem:[#allocation5 + $0x90] sm:$0xff]
        %v314 = vld [vmem:[#allocation5 + $0x98] sm:$0xff]
        %v315 = vld [vmem:[#allocation5 + $0xa0] sm:$0xff]
        %v316 = vld [vmem:[#allocation5 + $0xa8] sm:$0xff]
        %v317 = vld [vmem:[#allocation5 + $0xb0] sm:$0xff]
        %v318 = vld [vmem:[#allocation5 + $0xb8] sm:$0xff]
        %v319 = vld [vmem:[#allocation5 + $0xc0] sm:$0xff]
        %v320 = vld [vmem:[#allocation5 + $0xc8] sm:$0xff]
        %v321 = vld [vmem:[#allocation5 + $0xd0] sm:$0xff]
        %v322 = vld [vmem:[#allocation5 + $0xd8] sm:$0xff]
        %v323 = vld [vmem:[#allocation5 + $0xe0] sm:$0xff]
        %v324 = vld [vmem:[#allocation5 + $0xe8] sm:$0xff]
        %v325 = vld [vmem:[#allocation5 + $0xf0] sm:$0xff]
        %v326 = vld [vmem:[#allocation5 + $0xf8] sm:$0xff]
        %v327 = vld [vmem:[#allocation5 + $0x100] sm:$0xff]
        %v328 = vld [vmem:[#allocation5 + $0x108] sm:$0xff]
        %v329 = vld [vmem:[#allocation5 + $0x110] sm:$0xff]
        %v330 = vld [vmem:[#allocation5 + $0x118] sm:$0xff]
        %v331 = vld [vmem:[#allocation5 + $0x120] sm:$0xff]
        %v332 = vld [vmem:[#allocation5 + $0x128] sm:$0xff]
        %v333 = vld [vmem:[#allocation5 + $0x130] sm:$0xff]
        %v334 = vld [vmem:[#allocation5 + $0x138] sm:$0xff]
        %v335 = vld [vmem:[#allocation5 + $0x140] sm:$0xff]
        %v336 = vld [vmem:[#allocation5 + $0x148] sm:$0xff]
        %v337 = vld [vmem:[#allocation5 + $0x150] sm:$0xff]
        %v338 = vld [vmem:[#allocation5 + $0x158] sm:$0xff]
        %v339 = vld [vmem:[#allocation5 + $0x160] sm:$0xff]
        %v340 = vld [vmem:[#allocation5 + $0x168] sm:$0xff]
        %v341 = vld [vmem:[#allocation5 + $0x170] sm:$0xff]
        %v342 = vld [vmem:[#allocation5 + $0x178] sm:$0xff]
        %v343 = vld [vmem:[#allocation7] sm:$0x7]
        %v345 = vperm.slane %v343, 0
        %v346 = vperm.slane %v343, 1
        %v347 = vperm.slane %v343, 2
        %351 = vmatpush.msra.mxu0 %v340
        %352 = vmatpush.msra.mxu0 %v337
        %353 = vmatpush.msra.mxu0 %v334
        %354 = vmatpush.msra.mxu0 %v331
        %355 = vmatpush.msra.mxu0 %v328
        %356 = vmatpush.msra.mxu0 %v325
        %357 = vmatpush.msra.mxu0 %v322
        %358 = vmatpush.msra.mxu0 %v319
        %359 = vmatpush.msra.mxu0 %v316
        %360 = vmatpush.msra.mxu0 %v313
        %361 = vmatpush.msra.mxu0 %v310
        %362 = vmatpush.msra.mxu0 %v307
        %363 = vmatpush.msra.mxu0 %v304
        %364 = vmatpush.msra.mxu0 %v301
        %365 = vmatpush.msra.mxu0 %v298
        %366 = vmatpush.msra.mxu0 %v295
        %367 = vmatmul.f32.gmra.mxu0 %v293
        %v368 = vpop.f32.mrf.mxu0
        %v369 = vadd.f32 %v345, %v368
        %370 = vmatmul.f32.gmra.mxu0 %v294
        %v371 = vpop.f32.mrf.mxu0
        %v372 = vadd.f32 %v345, %v371
        %373 = vdwg.mxu0
        %374 = vmatpush.msra.mxu0 %v341
        %375 = vmatpush.msra.mxu0 %v338
        %376 = vmatpush.msra.mxu0 %v335
        %377 = vmatpush.msra.mxu0 %v332
        %378 = vmatpush.msra.mxu0 %v329
        %379 = vmatpush.msra.mxu0 %v326
        %380 = vmatpush.msra.mxu0 %v323
        %381 = vmatpush.msra.mxu0 %v320
        %382 = vmatpush.msra.mxu0 %v317
        %383 = vmatpush.msra.mxu0 %v314
        %384 = vmatpush.msra.mxu0 %v311
        %385 = vmatpush.msra.mxu0 %v308
        %386 = vmatpush.msra.mxu0 %v305
        %387 = vmatpush.msra.mxu0 %v302
        %388 = vmatpush.msra.mxu0 %v299
        %389 = vmatpush.msra.mxu0 %v296
        %390 = vmatmul.f32.gmra.mxu0 %v293
        %v391 = vpop.f32.mrf.mxu0
        %v392 = vadd.f32 %v346, %v391
        %393 = vmatmul.f32.gmra.mxu0 %v294
        %v394 = vpop.f32.mrf.mxu0
        %v395 = vadd.f32 %v346, %v394
        %396 = vdwg.mxu0
        %397 = vmatpush.msra.mxu0 %v342
        %398 = vmatpush.msra.mxu0 %v339
        %399 = vmatpush.msra.mxu0 %v336
        %400 = vmatpush.msra.mxu0 %v333
        %401 = vmatpush.msra.mxu0 %v330
        %402 = vmatpush.msra.mxu0 %v327
        %403 = vmatpush.msra.mxu0 %v324
        %404 = vmatpush.msra.mxu0 %v321
        %405 = vmatpush.msra.mxu0 %v318
        %406 = vmatpush.msra.mxu0 %v315
        %407 = vmatpush.msra.mxu0 %v312
        %408 = vmatpush.msra.mxu0 %v309
        %409 = vmatpush.msra.mxu0 %v306
        %410 = vmatpush.msra.mxu0 %v303
        %411 = vmatpush.msra.mxu0 %v300
        %412 = vmatpush.msra.mxu0 %v297
        %413 = vmatmul.f32.gmra.mxu0 %v293
        %v414 = vpop.f32.mrf.mxu0
        %v415 = vadd.f32 %v347, %v414
        %416 = vmatmul.f32.gmra.mxu0 %v294
        %v417 = vpop.f32.mrf.mxu0
        %v418 = vadd.f32 %v347, %v417
        %419 = vdwg.mxu0
        %v420 = vmul.f32 %v369, 0.25
        %v421 = vmul.f32 %v372, 0.25
        %424 = vrot.lane.b32.xlu0 %v420, 112
        %v425 = vpop.permute.xlu0 %424
        %426 = vrot.lane.b32.xlu0 %v421, 112
        %v427 = vpop.permute.xlu0 %426
        %430 = vrot.lane.b32.xlu0 %v420, 96
        %v431 = vpop.permute.xlu0 %430
        %432 = vrot.lane.b32.xlu0 %v421, 96
        %v433 = vpop.permute.xlu0 %432
        %436 = vrot.lane.b32.xlu0 %v420, 80
        %v437 = vpop.permute.xlu0 %436
        %438 = vrot.lane.b32.xlu0 %v421, 80
        %v439 = vpop.permute.xlu0 %438
        %442 = vrot.lane.b32.xlu0 %v420, 64
        %v443 = vpop.permute.xlu0 %442
        %444 = vrot.lane.b32.xlu0 %v421, 64
        %v445 = vpop.permute.xlu0 %444
        %448 = vrot.lane.b32.xlu0 %v420, 48
        %v449 = vpop.permute.xlu0 %448
        %450 = vrot.lane.b32.xlu0 %v421, 48
        %v451 = vpop.permute.xlu0 %450
        %454 = vrot.lane.b32.xlu0 %v420, 32
        %v455 = vpop.permute.xlu0 %454
        %456 = vrot.lane.b32.xlu0 %v421, 32
        %v457 = vpop.permute.xlu0 %456
        %460 = vrot.lane.b32.xlu0 %v420, 16
        %v461 = vpop.permute.xlu0 %460
        %462 = vrot.lane.b32.xlu0 %v421, 16
        %v463 = vpop.permute.xlu0 %462
        %v466 = vrot.slane %v431, 4
        %vm467 = vcmask 1047556
        %v468 = vsel %vm467, %v466, %v420
        %v469 = vrot.slane %v420, 4
        %v470 = vsel %vm467, %v431, %v469
        %v472 = vunpack.c.l.s4 1983009808
        %v473 = vunpack.c.0.s8 %v472
        %v474 = vperm.slane %v468, %v473
        %v476 = vunpack.c.l.s4 1983009808
        %v477 = vunpack.c.0.s8 %v476
        %v478 = vperm.slane %v470, %v477
        %v479 = vrot.slane %v437, 4
        %v480 = vsel %vm467, %v479, %v425
        %v481 = vrot.slane %v425, 4
        %v482 = vsel %vm467, %v437, %v481
        %v484 = vunpack.c.l.s4 1983009808
        %v485 = vunpack.c.0.s8 %v484
        %v486 = vperm.slane %v480, %v485
        %v488 = vunpack.c.l.s4 1983009808
        %v489 = vunpack.c.0.s8 %v488
        %v490 = vperm.slane %v482, %v489
        %v491 = vrot.slane %v455, 4
        %v492 = vsel %vm467, %v491, %v443
        %v493 = vrot.slane %v443, 4
        %v494 = vsel %vm467, %v455, %v493
        %v496 = vunpack.c.l.s4 1983009808
        %v497 = vunpack.c.0.s8 %v496
        %v498 = vperm.slane %v492, %v497
        %v500 = vunpack.c.l.s4 1983009808
        %v501 = vunpack.c.0.s8 %v500
        %v502 = vperm.slane %v494, %v501
        %v503 = vrot.slane %v461, 4
        %v504 = vsel %vm467, %v503, %v449
        %v505 = vrot.slane %v449, 4
        %v506 = vsel %vm467, %v461, %v505
        %v508 = vunpack.c.l.s4 1983009808
        %v509 = vunpack.c.0.s8 %v508
        %v510 = vperm.slane %v504, %v509
        %v512 = vunpack.c.l.s4 1983009808
        %v513 = vunpack.c.0.s8 %v512
        %v514 = vperm.slane %v506, %v513
        %v515 = vrot.slane %v486, 4
        %v516 = vsel %vm467, %v515, %v474
        %v517 = vrot.slane %v474, 4
        %v518 = vsel %vm467, %v486, %v517
        %v520 = vunpack.c.l.s4 1934713408
        %v521 = vunpack.c.0.s8 %v520
        %v522 = vperm.slane %v516, %v521
        %v524 = vunpack.c.l.s4 1934713408
        %v525 = vunpack.c.0.s8 %v524
        %v526 = vperm.slane %v518, %v525
        %v527 = vrot.slane %v490, 4
        %v528 = vsel %vm467, %v527, %v478
        %v529 = vrot.slane %v478, 4
        %v530 = vsel %vm467, %v490, %v529
        %v532 = vunpack.c.l.s4 1934713408
        %v533 = vunpack.c.0.s8 %v532
        %v534 = vperm.slane %v528, %v533
        %v536 = vunpack.c.l.s4 1934713408
        %v537 = vunpack.c.0.s8 %v536
        %v538 = vperm.slane %v530, %v537
        %v539 = vrot.slane %v510, 4
        %v540 = vsel %vm467, %v539, %v498
        %v541 = vrot.slane %v498, 4
        %v542 = vsel %vm467, %v510, %v541
        %v544 = vunpack.c.l.s4 1934713408
        %v545 = vunpack.c.0.s8 %v544
        %v546 = vperm.slane %v540, %v545
        %v548 = vunpack.c.l.s4 1934713408
        %v549 = vunpack.c.0.s8 %v548
        %v550 = vperm.slane %v542, %v549
        %v551 = vrot.slane %v514, 4
        %v552 = vsel %vm467, %v551, %v502
        %v553 = vrot.slane %v502, 4
        %v554 = vsel %vm467, %v514, %v553
        %v556 = vunpack.c.l.s4 1934713408
        %v557 = vunpack.c.0.s8 %v556
        %v558 = vperm.slane %v552, %v557
        %v560 = vunpack.c.l.s4 1934713408
        %v561 = vunpack.c.0.s8 %v560
        %v562 = vperm.slane %v554, %v561
        %v563 = vrot.slane %v546, 4
        %v564 = vsel %vm467, %v563, %v522
        %v565 = vrot.slane %v522, 4
        %v566 = vsel %vm467, %v546, %v565
        %v567 = vrot.slane %v550, 4
        %v568 = vsel %vm467, %v567, %v526
        %v569 = vrot.slane %v526, 4
        %v570 = vsel %vm467, %v550, %v569
        %v571 = vrot.slane %v558, 4
        %v572 = vsel %vm467, %v571, %v534
        %v573 = vrot.slane %v534, 4
        %v574 = vsel %vm467, %v558, %v573
        %v575 = vrot.slane %v562, 4
        %v576 = vsel %vm467, %v575, %v538
        %v577 = vrot.slane %v538, 4
        %v578 = vsel %vm467, %v562, %v577
        %v579 = vrot.slane %v433, 4
        %v580 = vsel %vm467, %v579, %v421
        %v581 = vrot.slane %v421, 4
        %v582 = vsel %vm467, %v433, %v581
        %v584 = vunpack.c.l.s4 1983009808
        %v585 = vunpack.c.0.s8 %v584
        %v586 = vperm.slane %v580, %v585
        %v588 = vunpack.c.l.s4 1983009808
        %v589 = vunpack.c.0.s8 %v588
        %v590 = vperm.slane %v582, %v589
        %v591 = vrot.slane %v439, 4
        %v592 = vsel %vm467, %v591, %v427
        %v593 = vrot.slane %v427, 4
        %v594 = vsel %vm467, %v439, %v593
        %v596 = vunpack.c.l.s4 1983009808
        %v597 = vunpack.c.0.s8 %v596
        %v598 = vperm.slane %v592, %v597
        %v600 = vunpack.c.l.s4 1983009808
        %v601 = vunpack.c.0.s8 %v600
        %v602 = vperm.slane %v594, %v601
        %v603 = vrot.slane %v457, 4
        %v604 = vsel %vm467, %v603, %v445
        %v605 = vrot.slane %v445, 4
        %v606 = vsel %vm467, %v457, %v605
        %v608 = vunpack.c.l.s4 1983009808
        %v609 = vunpack.c.0.s8 %v608
        %v610 = vperm.slane %v604, %v609
        %v612 = vunpack.c.l.s4 1983009808
        %v613 = vunpack.c.0.s8 %v612
        %v614 = vperm.slane %v606, %v613
        %v615 = vrot.slane %v463, 4
        %v616 = vsel %vm467, %v615, %v451
        %v617 = vrot.slane %v451, 4
        %v618 = vsel %vm467, %v463, %v617
        %v620 = vunpack.c.l.s4 1983009808
        %v621 = vunpack.c.0.s8 %v620
        %v622 = vperm.slane %v616, %v621
        %v624 = vunpack.c.l.s4 1983009808
        %v625 = vunpack.c.0.s8 %v624
        %v626 = vperm.slane %v618, %v625
        %v627 = vrot.slane %v598, 4
        %v628 = vsel %vm467, %v627, %v586
        %v629 = vrot.slane %v586, 4
        %v630 = vsel %vm467, %v598, %v629
        %v632 = vunpack.c.l.s4 1934713408
        %v633 = vunpack.c.0.s8 %v632
        %v634 = vperm.slane %v628, %v633
        %v636 = vunpack.c.l.s4 1934713408
        %v637 = vunpack.c.0.s8 %v636
        %v638 = vperm.slane %v630, %v637
        %v639 = vrot.slane %v602, 4
        %v640 = vsel %vm467, %v639, %v590
        %v641 = vrot.slane %v590, 4
        %v642 = vsel %vm467, %v602, %v641
        %v644 = vunpack.c.l.s4 1934713408
        %v645 = vunpack.c.0.s8 %v644
        %v646 = vperm.slane %v640, %v645
        %v648 = vunpack.c.l.s4 1934713408
        %v649 = vunpack.c.0.s8 %v648
        %v650 = vperm.slane %v642, %v649
        %v651 = vrot.slane %v622, 4
        %v652 = vsel %vm467, %v651, %v610
        %v653 = vrot.slane %v610, 4
        %v654 = vsel %vm467, %v622, %v653
        %v656 = vunpack.c.l.s4 1934713408
        %v657 = vunpack.c.0.s8 %v656
        %v658 = vperm.slane %v652, %v657
        %v660 = vunpack.c.l.s4 1934713408
        %v661 = vunpack.c.0.s8 %v660
        %v662 = vperm.slane %v654, %v661
        %v663 = vrot.slane %v626, 4
        %v664 = vsel %vm467, %v663, %v614
        %v665 = vrot.slane %v614, 4
        %v666 = vsel %vm467, %v626, %v665
        %v668 = vunpack.c.l.s4 1934713408
        %v669 = vunpack.c.0.s8 %v668
        %v670 = vperm.slane %v664, %v669
        %v672 = vunpack.c.l.s4 1934713408
        %v673 = vunpack.c.0.s8 %v672
        %v674 = vperm.slane %v666, %v673
        %v675 = vrot.slane %v658, 4
        %v676 = vsel %vm467, %v675, %v634
        %v677 = vrot.slane %v634, 4
        %v678 = vsel %vm467, %v658, %v677
        %v679 = vrot.slane %v662, 4
        %v680 = vsel %vm467, %v679, %v638
        %v681 = vrot.slane %v638, 4
        %v682 = vsel %vm467, %v662, %v681
        %v683 = vrot.slane %v670, 4
        %v684 = vsel %vm467, %v683, %v646
        %v685 = vrot.slane %v646, 4
        %v686 = vsel %vm467, %v670, %v685
        %v687 = vrot.slane %v674, 4
        %v688 = vsel %vm467, %v687, %v650
        %v689 = vrot.slane %v650, 4
        %v690 = vsel %vm467, %v674, %v689
        %v691 = vrot.slane %v568, 4
        %v692 = vsel %vm467, %v691, %v564
        %v693 = vrot.slane %v564, 4
        %v694 = vsel %vm467, %v568, %v693
        %v696 = vunpack.c.l.s4 1983009808
        %v697 = vunpack.c.0.s8 %v696
        %v698 = vperm.slane %v692, %v697
        %v700 = vunpack.c.l.s4 1983009808
        %v701 = vunpack.c.0.s8 %v700
        %v702 = vperm.slane %v694, %v701
        %v703 = vrot.slane %v570, 4
        %v704 = vsel %vm467, %v703, %v566
        %v705 = vrot.slane %v566, 4
        %v706 = vsel %vm467, %v570, %v705
        %v708 = vunpack.c.l.s4 1983009808
        %v709 = vunpack.c.0.s8 %v708
        %v710 = vperm.slane %v704, %v709
        %v712 = vunpack.c.l.s4 1983009808
        %v713 = vunpack.c.0.s8 %v712
        %v714 = vperm.slane %v706, %v713
        %v715 = vrot.slane %v576, 4
        %v716 = vsel %vm467, %v715, %v572
        %v717 = vrot.slane %v572, 4
        %v718 = vsel %vm467, %v576, %v717
        %v720 = vunpack.c.l.s4 1983009808
        %v721 = vunpack.c.0.s8 %v720
        %v722 = vperm.slane %v716, %v721
        %v724 = vunpack.c.l.s4 1983009808
        %v725 = vunpack.c.0.s8 %v724
        %v726 = vperm.slane %v718, %v725
        %v727 = vrot.slane %v578, 4
        %v728 = vsel %vm467, %v727, %v574
        %v729 = vrot.slane %v574, 4
        %v730 = vsel %vm467, %v578, %v729
        %v732 = vunpack.c.l.s4 1983009808
        %v733 = vunpack.c.0.s8 %v732
        %v734 = vperm.slane %v728, %v733
        %v736 = vunpack.c.l.s4 1983009808
        %v737 = vunpack.c.0.s8 %v736
        %v738 = vperm.slane %v730, %v737
        %v739 = vrot.slane %v710, 4
        %v740 = vsel %vm467, %v739, %v698
        %v741 = vrot.slane %v698, 4
        %v742 = vsel %vm467, %v710, %v741
        %v744 = vunpack.c.l.s4 1934713408
        %v745 = vunpack.c.0.s8 %v744
        %v746 = vperm.slane %v740, %v745
        %v748 = vunpack.c.l.s4 1934713408
        %v749 = vunpack.c.0.s8 %v748
        %v750 = vperm.slane %v742, %v749
        %v751 = vrot.slane %v714, 4
        %v752 = vsel %vm467, %v751, %v702
        %v753 = vrot.slane %v702, 4
        %v754 = vsel %vm467, %v714, %v753
        %v756 = vunpack.c.l.s4 1934713408
        %v757 = vunpack.c.0.s8 %v756
        %v758 = vperm.slane %v752, %v757
        %v760 = vunpack.c.l.s4 1934713408
        %v761 = vunpack.c.0.s8 %v760
        %v762 = vperm.slane %v754, %v761
        %v763 = vrot.slane %v734, 4
        %v764 = vsel %vm467, %v763, %v722
        %v765 = vrot.slane %v722, 4
        %v766 = vsel %vm467, %v734, %v765
        %v768 = vunpack.c.l.s4 1934713408
        %v769 = vunpack.c.0.s8 %v768
        %v770 = vperm.slane %v764, %v769
        %v772 = vunpack.c.l.s4 1934713408
        %v773 = vunpack.c.0.s8 %v772
        %v774 = vperm.slane %v766, %v773
        %v775 = vrot.slane %v738, 4
        %v776 = vsel %vm467, %v775, %v726
        %v777 = vrot.slane %v726, 4
        %v778 = vsel %vm467, %v738, %v777
        %v780 = vunpack.c.l.s4 1934713408
        %v781 = vunpack.c.0.s8 %v780
        %v782 = vperm.slane %v776, %v781
        %v784 = vunpack.c.l.s4 1934713408
        %v785 = vunpack.c.0.s8 %v784
        %v786 = vperm.slane %v778, %v785
        %v787 = vrot.slane %v770, 4
        %v788 = vsel %vm467, %v787, %v746
        %v789 = vrot.slane %v746, 4
        %v790 = vsel %vm467, %v770, %v789
        %v791 = vrot.slane %v774, 4
        %v792 = vsel %vm467, %v791, %v750
        %v793 = vrot.slane %v750, 4
        %v794 = vsel %vm467, %v774, %v793
        %v795 = vrot.slane %v782, 4
        %v796 = vsel %vm467, %v795, %v758
        %v797 = vrot.slane %v758, 4
        %v798 = vsel %vm467, %v782, %v797
        %v799 = vrot.slane %v786, 4
        %v800 = vsel %vm467, %v799, %v762
        %v801 = vrot.slane %v762, 4
        %v802 = vsel %vm467, %v786, %v801
        %v803 = vrot.slane %v680, 4
        %v804 = vsel %vm467, %v803, %v676
        %v805 = vrot.slane %v676, 4
        %v806 = vsel %vm467, %v680, %v805
        %v808 = vunpack.c.l.s4 1983009808
        %v809 = vunpack.c.0.s8 %v808
        %v810 = vperm.slane %v804, %v809
        %v812 = vunpack.c.l.s4 1983009808
        %v813 = vunpack.c.0.s8 %v812
        %v814 = vperm.slane %v806, %v813
        %v815 = vrot.slane %v682, 4
        %v816 = vsel %vm467, %v815, %v678
        %v817 = vrot.slane %v678, 4
        %v818 = vsel %vm467, %v682, %v817
        %v820 = vunpack.c.l.s4 1983009808
        %v821 = vunpack.c.0.s8 %v820
        %v822 = vperm.slane %v816, %v821
        %v824 = vunpack.c.l.s4 1983009808
        %v825 = vunpack.c.0.s8 %v824
        %v826 = vperm.slane %v818, %v825
        %v827 = vrot.slane %v688, 4
        %v828 = vsel %vm467, %v827, %v684
        %v829 = vrot.slane %v684, 4
        %v830 = vsel %vm467, %v688, %v829
        %v832 = vunpack.c.l.s4 1983009808
        %v833 = vunpack.c.0.s8 %v832
        %v834 = vperm.slane %v828, %v833
        %v836 = vunpack.c.l.s4 1983009808
        %v837 = vunpack.c.0.s8 %v836
        %v838 = vperm.slane %v830, %v837
        %v839 = vrot.slane %v690, 4
        %v840 = vsel %vm467, %v839, %v686
        %v841 = vrot.slane %v686, 4
        %v842 = vsel %vm467, %v690, %v841
        %v844 = vunpack.c.l.s4 1983009808
        %v845 = vunpack.c.0.s8 %v844
        %v846 = vperm.slane %v840, %v845
        %v848 = vunpack.c.l.s4 1983009808
        %v849 = vunpack.c.0.s8 %v848
        %v850 = vperm.slane %v842, %v849
        %v851 = vrot.slane %v822, 4
        %v852 = vsel %vm467, %v851, %v810
        %v853 = vrot.slane %v810, 4
        %v854 = vsel %vm467, %v822, %v853
        %v856 = vunpack.c.l.s4 1934713408
        %v857 = vunpack.c.0.s8 %v856
        %v858 = vperm.slane %v852, %v857
        %v860 = vunpack.c.l.s4 1934713408
        %v861 = vunpack.c.0.s8 %v860
        %v862 = vperm.slane %v854, %v861
        %v863 = vrot.slane %v826, 4
        %v864 = vsel %vm467, %v863, %v814
        %v865 = vrot.slane %v814, 4
        %v866 = vsel %vm467, %v826, %v865
        %v868 = vunpack.c.l.s4 1934713408
        %v869 = vunpack.c.0.s8 %v868
        %v870 = vperm.slane %v864, %v869
        %v872 = vunpack.c.l.s4 1934713408
        %v873 = vunpack.c.0.s8 %v872
        %v874 = vperm.slane %v866, %v873
        %v875 = vrot.slane %v846, 4
        %v876 = vsel %vm467, %v875, %v834
        %v877 = vrot.slane %v834, 4
        %v878 = vsel %vm467, %v846, %v877
        %v880 = vunpack.c.l.s4 1934713408
        %v881 = vunpack.c.0.s8 %v880
        %v882 = vperm.slane %v876, %v881
        %v884 = vunpack.c.l.s4 1934713408
        %v885 = vunpack.c.0.s8 %v884
        %v886 = vperm.slane %v878, %v885
        %v887 = vrot.slane %v850, 4
        %v888 = vsel %vm467, %v887, %v838
        %v889 = vrot.slane %v838, 4
        %v890 = vsel %vm467, %v850, %v889
        %v892 = vunpack.c.l.s4 1934713408
        %v893 = vunpack.c.0.s8 %v892
        %v894 = vperm.slane %v888, %v893
        %v896 = vunpack.c.l.s4 1934713408
        %v897 = vunpack.c.0.s8 %v896
        %v898 = vperm.slane %v890, %v897
        %v899 = vrot.slane %v882, 4
        %v900 = vsel %vm467, %v899, %v858
        %v901 = vrot.slane %v858, 4
        %v902 = vsel %vm467, %v882, %v901
        %v903 = vrot.slane %v886, 4
        %v904 = vsel %vm467, %v903, %v862
        %v905 = vrot.slane %v862, 4
        %v906 = vsel %vm467, %v886, %v905
        %v907 = vrot.slane %v894, 4
        %v908 = vsel %vm467, %v907, %v870
        %v909 = vrot.slane %v870, 4
        %v910 = vsel %vm467, %v894, %v909
        %v911 = vrot.slane %v898, 4
        %v912 = vsel %vm467, %v911, %v874
        %v913 = vrot.slane %v874, 4
        %v914 = vsel %vm467, %v898, %v913
        %917 = vrot.lane.b32.xlu0 %v392, 112
        %v918 = vpop.permute.xlu0 %917
        %919 = vrot.lane.b32.xlu0 %v395, 112
        %v920 = vpop.permute.xlu0 %919
        %923 = vrot.lane.b32.xlu0 %v392, 96
        %v924 = vpop.permute.xlu0 %923
        %925 = vrot.lane.b32.xlu0 %v395, 96
        %v926 = vpop.permute.xlu0 %925
        %929 = vrot.lane.b32.xlu0 %v392, 80
        %v930 = vpop.permute.xlu0 %929
        %931 = vrot.lane.b32.xlu0 %v395, 80
        %v932 = vpop.permute.xlu0 %931
        %935 = vrot.lane.b32.xlu0 %v392, 64
        %v936 = vpop.permute.xlu0 %935
        %937 = vrot.lane.b32.xlu0 %v395, 64
        %v938 = vpop.permute.xlu0 %937
        %941 = vrot.lane.b32.xlu0 %v392, 48
        %v942 = vpop.permute.xlu0 %941
        %943 = vrot.lane.b32.xlu0 %v395, 48
        %v944 = vpop.permute.xlu0 %943
        %947 = vrot.lane.b32.xlu0 %v392, 32
        %v948 = vpop.permute.xlu0 %947
        %949 = vrot.lane.b32.xlu0 %v395, 32
        %v950 = vpop.permute.xlu0 %949
        %953 = vrot.lane.b32.xlu0 %v392, 16
        %v954 = vpop.permute.xlu0 %953
        %955 = vrot.lane.b32.xlu0 %v395, 16
        %v956 = vpop.permute.xlu0 %955
        %v959 = vrot.slane %v924, 4
        %v960 = vsel %vm467, %v959, %v392
        %v961 = vrot.slane %v392, 4
        %v962 = vsel %vm467, %v924, %v961
        %v964 = vunpack.c.l.s4 1983009808
        %v965 = vunpack.c.0.s8 %v964
        %v966 = vperm.slane %v960, %v965
        %v968 = vunpack.c.l.s4 1983009808
        %v969 = vunpack.c.0.s8 %v968
        %v970 = vperm.slane %v962, %v969
        %v971 = vrot.slane %v930, 4
        %v972 = vsel %vm467, %v971, %v918
        %v973 = vrot.slane %v918, 4
        %v974 = vsel %vm467, %v930, %v973
        %v976 = vunpack.c.l.s4 1983009808
        %v977 = vunpack.c.0.s8 %v976
        %v978 = vperm.slane %v972, %v977
        %v980 = vunpack.c.l.s4 1983009808
        %v981 = vunpack.c.0.s8 %v980
        %v982 = vperm.slane %v974, %v981
        %v983 = vrot.slane %v948, 4
        %v984 = vsel %vm467, %v983, %v936
        %v985 = vrot.slane %v936, 4
        %v986 = vsel %vm467, %v948, %v985
        %v988 = vunpack.c.l.s4 1983009808
        %v989 = vunpack.c.0.s8 %v988
        %v990 = vperm.slane %v984, %v989
        %v992 = vunpack.c.l.s4 1983009808
        %v993 = vunpack.c.0.s8 %v992
        %v994 = vperm.slane %v986, %v993
        %v995 = vrot.slane %v954, 4
        %v996 = vsel %vm467, %v995, %v942
        %v997 = vrot.slane %v942, 4
        %v998 = vsel %vm467, %v954, %v997
        %v1000 = vunpack.c.l.s4 1983009808
        %v1001 = vunpack.c.0.s8 %v1000
        %v1002 = vperm.slane %v996, %v1001
        %v1004 = vunpack.c.l.s4 1983009808
        %v1005 = vunpack.c.0.s8 %v1004
        %v1006 = vperm.slane %v998, %v1005
        %v1007 = vrot.slane %v978, 4
        %v1008 = vsel %vm467, %v1007, %v966
        %v1009 = vrot.slane %v966, 4
        %v1010 = vsel %vm467, %v978, %v1009
        %v1012 = vunpack.c.l.s4 1934713408
        %v1013 = vunpack.c.0.s8 %v1012
        %v1014 = vperm.slane %v1008, %v1013
        %v1016 = vunpack.c.l.s4 1934713408
        %v1017 = vunpack.c.0.s8 %v1016
        %v1018 = vperm.slane %v1010, %v1017
        %v1019 = vrot.slane %v982, 4
        %v1020 = vsel %vm467, %v1019, %v970
        %v1021 = vrot.slane %v970, 4
        %v1022 = vsel %vm467, %v982, %v1021
        %v1024 = vunpack.c.l.s4 1934713408
        %v1025 = vunpack.c.0.s8 %v1024
        %v1026 = vperm.slane %v1020, %v1025
        %v1028 = vunpack.c.l.s4 1934713408
        %v1029 = vunpack.c.0.s8 %v1028
        %v1030 = vperm.slane %v1022, %v1029
        %v1031 = vrot.slane %v1002, 4
        %v1032 = vsel %vm467, %v1031, %v990
        %v1033 = vrot.slane %v990, 4
        %v1034 = vsel %vm467, %v1002, %v1033
        %v1036 = vunpack.c.l.s4 1934713408
        %v1037 = vunpack.c.0.s8 %v1036
        %v1038 = vperm.slane %v1032, %v1037
        %v1040 = vunpack.c.l.s4 1934713408
        %v1041 = vunpack.c.0.s8 %v1040
        %v1042 = vperm.slane %v1034, %v1041
        %v1043 = vrot.slane %v1006, 4
        %v1044 = vsel %vm467, %v1043, %v994
        %v1045 = vrot.slane %v994, 4
        %v1046 = vsel %vm467, %v1006, %v1045
        %v1048 = vunpack.c.l.s4 1934713408
        %v1049 = vunpack.c.0.s8 %v1048
        %v1050 = vperm.slane %v1044, %v1049
        %v1052 = vunpack.c.l.s4 1934713408
        %v1053 = vunpack.c.0.s8 %v1052
        %v1054 = vperm.slane %v1046, %v1053
        %v1055 = vrot.slane %v1038, 4
        %v1056 = vsel %vm467, %v1055, %v1014
        %v1057 = vrot.slane %v1014, 4
        %v1058 = vsel %vm467, %v1038, %v1057
        %v1059 = vrot.slane %v1042, 4
        %v1060 = vsel %vm467, %v1059, %v1018
        %v1061 = vrot.slane %v1018, 4
        %v1062 = vsel %vm467, %v1042, %v1061
        %v1063 = vrot.slane %v1050, 4
        %v1064 = vsel %vm467, %v1063, %v1026
        %v1065 = vrot.slane %v1026, 4
        %v1066 = vsel %vm467, %v1050, %v1065
        %v1067 = vrot.slane %v1054, 4
        %v1068 = vsel %vm467, %v1067, %v1030
        %v1069 = vrot.slane %v1030, 4
        %v1070 = vsel %vm467, %v1054, %v1069
        %v1071 = vrot.slane %v926, 4
        %v1072 = vsel %vm467, %v1071, %v395
        %v1073 = vrot.slane %v395, 4
        %v1074 = vsel %vm467, %v926, %v1073
        %v1076 = vunpack.c.l.s4 1983009808
        %v1077 = vunpack.c.0.s8 %v1076
        %v1078 = vperm.slane %v1072, %v1077
        %v1080 = vunpack.c.l.s4 1983009808
        %v1081 = vunpack.c.0.s8 %v1080
        %v1082 = vperm.slane %v1074, %v1081
        %v1083 = vrot.slane %v932, 4
        %v1084 = vsel %vm467, %v1083, %v920
        %v1085 = vrot.slane %v920, 4
        %v1086 = vsel %vm467, %v932, %v1085
        %v1088 = vunpack.c.l.s4 1983009808
        %v1089 = vunpack.c.0.s8 %v1088
        %v1090 = vperm.slane %v1084, %v1089
        %v1092 = vunpack.c.l.s4 1983009808
        %v1093 = vunpack.c.0.s8 %v1092
        %v1094 = vperm.slane %v1086, %v1093
        %v1095 = vrot.slane %v950, 4
        %v1096 = vsel %vm467, %v1095, %v938
        %v1097 = vrot.slane %v938, 4
        %v1098 = vsel %vm467, %v950, %v1097
        %v1100 = vunpack.c.l.s4 1983009808
        %v1101 = vunpack.c.0.s8 %v1100
        %v1102 = vperm.slane %v1096, %v1101
        %v1104 = vunpack.c.l.s4 1983009808
        %v1105 = vunpack.c.0.s8 %v1104
        %v1106 = vperm.slane %v1098, %v1105
        %v1107 = vrot.slane %v956, 4
        %v1108 = vsel %vm467, %v1107, %v944
        %v1109 = vrot.slane %v944, 4
        %v1110 = vsel %vm467, %v956, %v1109
        %v1112 = vunpack.c.l.s4 1983009808
        %v1113 = vunpack.c.0.s8 %v1112
        %v1114 = vperm.slane %v1108, %v1113
        %v1116 = vunpack.c.l.s4 1983009808
        %v1117 = vunpack.c.0.s8 %v1116
        %v1118 = vperm.slane %v1110, %v1117
        %v1119 = vrot.slane %v1090, 4
        %v1120 = vsel %vm467, %v1119, %v1078
        %v1121 = vrot.slane %v1078, 4
        %v1122 = vsel %vm467, %v1090, %v1121
        %v1124 = vunpack.c.l.s4 1934713408
        %v1125 = vunpack.c.0.s8 %v1124
        %v1126 = vperm.slane %v1120, %v1125
        %v1128 = vunpack.c.l.s4 1934713408
        %v1129 = vunpack.c.0.s8 %v1128
        %v1130 = vperm.slane %v1122, %v1129
        %v1131 = vrot.slane %v1094, 4
        %v1132 = vsel %vm467, %v1131, %v1082
        %v1133 = vrot.slane %v1082, 4
        %v1134 = vsel %vm467, %v1094, %v1133
        %v1136 = vunpack.c.l.s4 1934713408
        %v1137 = vunpack.c.0.s8 %v1136
        %v1138 = vperm.slane %v1132, %v1137
        %v1140 = vunpack.c.l.s4 1934713408
        %v1141 = vunpack.c.0.s8 %v1140
        %v1142 = vperm.slane %v1134, %v1141
        %v1143 = vrot.slane %v1114, 4
        %v1144 = vsel %vm467, %v1143, %v1102
        %v1145 = vrot.slane %v1102, 4
        %v1146 = vsel %vm467, %v1114, %v1145
        %v1148 = vunpack.c.l.s4 1934713408
        %v1149 = vunpack.c.0.s8 %v1148
        %v1150 = vperm.slane %v1144, %v1149
        %v1152 = vunpack.c.l.s4 1934713408
        %v1153 = vunpack.c.0.s8 %v1152
        %v1154 = vperm.slane %v1146, %v1153
        %v1155 = vrot.slane %v1118, 4
        %v1156 = vsel %vm467, %v1155, %v1106
        %v1157 = vrot.slane %v1106, 4
        %v1158 = vsel %vm467, %v1118, %v1157
        %v1160 = vunpack.c.l.s4 1934713408
        %v1161 = vunpack.c.0.s8 %v1160
        %v1162 = vperm.slane %v1156, %v1161
        %v1164 = vunpack.c.l.s4 1934713408
        %v1165 = vunpack.c.0.s8 %v1164
        %v1166 = vperm.slane %v1158, %v1165
        %v1167 = vrot.slane %v1150, 4
        %v1168 = vsel %vm467, %v1167, %v1126
        %v1169 = vrot.slane %v1126, 4
        %v1170 = vsel %vm467, %v1150, %v1169
        %v1171 = vrot.slane %v1154, 4
        %v1172 = vsel %vm467, %v1171, %v1130
        %v1173 = vrot.slane %v1130, 4
        %v1174 = vsel %vm467, %v1154, %v1173
        %v1175 = vrot.slane %v1162, 4
        %v1176 = vsel %vm467, %v1175, %v1138
        %v1177 = vrot.slane %v1138, 4
        %v1178 = vsel %vm467, %v1162, %v1177
        %v1179 = vrot.slane %v1166, 4
        %v1180 = vsel %vm467, %v1179, %v1142
        %v1181 = vrot.slane %v1142, 4
        %v1182 = vsel %vm467, %v1166, %v1181
        %v1183 = vrot.slane %v1060, 4
        %v1184 = vsel %vm467, %v1183, %v1056
        %v1185 = vrot.slane %v1056, 4
        %v1186 = vsel %vm467, %v1060, %v1185
        %v1188 = vunpack.c.l.s4 1983009808
        %v1189 = vunpack.c.0.s8 %v1188
        %v1190 = vperm.slane %v1184, %v1189
        %v1192 = vunpack.c.l.s4 1983009808
        %v1193 = vunpack.c.0.s8 %v1192
        %v1194 = vperm.slane %v1186, %v1193
        %v1195 = vrot.slane %v1062, 4
        %v1196 = vsel %vm467, %v1195, %v1058
        %v1197 = vrot.slane %v1058, 4
        %v1198 = vsel %vm467, %v1062, %v1197
        %v1200 = vunpack.c.l.s4 1983009808
        %v1201 = vunpack.c.0.s8 %v1200
        %v1202 = vperm.slane %v1196, %v1201
        %v1204 = vunpack.c.l.s4 1983009808
        %v1205 = vunpack.c.0.s8 %v1204
        %v1206 = vperm.slane %v1198, %v1205
        %v1207 = vrot.slane %v1068, 4
        %v1208 = vsel %vm467, %v1207, %v1064
        %v1209 = vrot.slane %v1064, 4
        %v1210 = vsel %vm467, %v1068, %v1209
        %v1212 = vunpack.c.l.s4 1983009808
        %v1213 = vunpack.c.0.s8 %v1212
        %v1214 = vperm.slane %v1208, %v1213
        %v1216 = vunpack.c.l.s4 1983009808
        %v1217 = vunpack.c.0.s8 %v1216
        %v1218 = vperm.slane %v1210, %v1217
        %v1219 = vrot.slane %v1070, 4
        %v1220 = vsel %vm467, %v1219, %v1066
        %v1221 = vrot.slane %v1066, 4
        %v1222 = vsel %vm467, %v1070, %v1221
        %v1224 = vunpack.c.l.s4 1983009808
        %v1225 = vunpack.c.0.s8 %v1224
        %v1226 = vperm.slane %v1220, %v1225
        %v1228 = vunpack.c.l.s4 1983009808
        %v1229 = vunpack.c.0.s8 %v1228
        %v1230 = vperm.slane %v1222, %v1229
        %v1231 = vrot.slane %v1202, 4
        %v1232 = vsel %vm467, %v1231, %v1190
        %v1233 = vrot.slane %v1190, 4
        %v1234 = vsel %vm467, %v1202, %v1233
        %v1236 = vunpack.c.l.s4 1934713408
        %v1237 = vunpack.c.0.s8 %v1236
        %v1238 = vperm.slane %v1232, %v1237
        %v1240 = vunpack.c.l.s4 1934713408
        %v1241 = vunpack.c.0.s8 %v1240
        %v1242 = vperm.slane %v1234, %v1241
        %v1243 = vrot.slane %v1206, 4
        %v1244 = vsel %vm467, %v1243, %v1194
        %v1245 = vrot.slane %v1194, 4
        %v1246 = vsel %vm467, %v1206, %v1245
        %v1248 = vunpack.c.l.s4 1934713408
        %v1249 = vunpack.c.0.s8 %v1248
        %v1250 = vperm.slane %v1244, %v1249
        %v1252 = vunpack.c.l.s4 1934713408
        %v1253 = vunpack.c.0.s8 %v1252
        %v1254 = vperm.slane %v1246, %v1253
        %v1255 = vrot.slane %v1226, 4
        %v1256 = vsel %vm467, %v1255, %v1214
        %v1257 = vrot.slane %v1214, 4
        %v1258 = vsel %vm467, %v1226, %v1257
        %v1260 = vunpack.c.l.s4 1934713408
        %v1261 = vunpack.c.0.s8 %v1260
        %v1262 = vperm.slane %v1256, %v1261
        %v1264 = vunpack.c.l.s4 1934713408
        %v1265 = vunpack.c.0.s8 %v1264
        %v1266 = vperm.slane %v1258, %v1265
        %v1267 = vrot.slane %v1230, 4
        %v1268 = vsel %vm467, %v1267, %v1218
        %v1269 = vrot.slane %v1218, 4
        %v1270 = vsel %vm467, %v1230, %v1269
        %v1272 = vunpack.c.l.s4 1934713408
        %v1273 = vunpack.c.0.s8 %v1272
        %v1274 = vperm.slane %v1268, %v1273
        %v1276 = vunpack.c.l.s4 1934713408
        %v1277 = vunpack.c.0.s8 %v1276
        %v1278 = vperm.slane %v1270, %v1277
        %v1279 = vrot.slane %v1262, 4
        %v1280 = vsel %vm467, %v1279, %v1238
        %v1281 = vrot.slane %v1238, 4
        %v1282 = vsel %vm467, %v1262, %v1281
        %v1283 = vrot.slane %v1266, 4
        %v1284 = vsel %vm467, %v1283, %v1242
        %v1285 = vrot.slane %v1242, 4
        %v1286 = vsel %vm467, %v1266, %v1285
        %v1287 = vrot.slane %v1274, 4
        %v1288 = vsel %vm467, %v1287, %v1250
        %v1289 = vrot.slane %v1250, 4
        %v1290 = vsel %vm467, %v1274, %v1289
        %v1291 = vrot.slane %v1278, 4
        %v1292 = vsel %vm467, %v1291, %v1254
        %v1293 = vrot.slane %v1254, 4
        %v1294 = vsel %vm467, %v1278, %v1293
        %v1295 = vrot.slane %v1172, 4
        %v1296 = vsel %vm467, %v1295, %v1168
        %v1297 = vrot.slane %v1168, 4
        %v1298 = vsel %vm467, %v1172, %v1297
        %v1300 = vunpack.c.l.s4 1983009808
        %v1301 = vunpack.c.0.s8 %v1300
        %v1302 = vperm.slane %v1296, %v1301
        %v1304 = vunpack.c.l.s4 1983009808
        %v1305 = vunpack.c.0.s8 %v1304
        %v1306 = vperm.slane %v1298, %v1305
        %v1307 = vrot.slane %v1174, 4
        %v1308 = vsel %vm467, %v1307, %v1170
        %v1309 = vrot.slane %v1170, 4
        %v1310 = vsel %vm467, %v1174, %v1309
        %v1312 = vunpack.c.l.s4 1983009808
        %v1313 = vunpack.c.0.s8 %v1312
        %v1314 = vperm.slane %v1308, %v1313
        %v1316 = vunpack.c.l.s4 1983009808
        %v1317 = vunpack.c.0.s8 %v1316
        %v1318 = vperm.slane %v1310, %v1317
        %v1319 = vrot.slane %v1180, 4
        %v1320 = vsel %vm467, %v1319, %v1176
        %v1321 = vrot.slane %v1176, 4
        %v1322 = vsel %vm467, %v1180, %v1321
        %v1324 = vunpack.c.l.s4 1983009808
        %v1325 = vunpack.c.0.s8 %v1324
        %v1326 = vperm.slane %v1320, %v1325
        %v1328 = vunpack.c.l.s4 1983009808
        %v1329 = vunpack.c.0.s8 %v1328
        %v1330 = vperm.slane %v1322, %v1329
        %v1331 = vrot.slane %v1182, 4
        %v1332 = vsel %vm467, %v1331, %v1178
        %v1333 = vrot.slane %v1178, 4
        %v1334 = vsel %vm467, %v1182, %v1333
        %v1336 = vunpack.c.l.s4 1983009808
        %v1337 = vunpack.c.0.s8 %v1336
        %v1338 = vperm.slane %v1332, %v1337
        %v1340 = vunpack.c.l.s4 1983009808
        %v1341 = vunpack.c.0.s8 %v1340
        %v1342 = vperm.slane %v1334, %v1341
        %v1343 = vrot.slane %v1314, 4
        %v1344 = vsel %vm467, %v1343, %v1302
        %v1345 = vrot.slane %v1302, 4
        %v1346 = vsel %vm467, %v1314, %v1345
        %v1348 = vunpack.c.l.s4 1934713408
        %v1349 = vunpack.c.0.s8 %v1348
        %v1350 = vperm.slane %v1344, %v1349
        %v1352 = vunpack.c.l.s4 1934713408
        %v1353 = vunpack.c.0.s8 %v1352
        %v1354 = vperm.slane %v1346, %v1353
        %v1355 = vrot.slane %v1318, 4
        %v1356 = vsel %vm467, %v1355, %v1306
        %v1357 = vrot.slane %v1306, 4
        %v1358 = vsel %vm467, %v1318, %v1357
        %v1360 = vunpack.c.l.s4 1934713408
        %v1361 = vunpack.c.0.s8 %v1360
        %v1362 = vperm.slane %v1356, %v1361
        %v1364 = vunpack.c.l.s4 1934713408
        %v1365 = vunpack.c.0.s8 %v1364
        %v1366 = vperm.slane %v1358, %v1365
        %v1367 = vrot.slane %v1338, 4
        %v1368 = vsel %vm467, %v1367, %v1326
        %v1369 = vrot.slane %v1326, 4
        %v1370 = vsel %vm467, %v1338, %v1369
        %v1372 = vunpack.c.l.s4 1934713408
        %v1373 = vunpack.c.0.s8 %v1372
        %v1374 = vperm.slane %v1368, %v1373
        %v1376 = vunpack.c.l.s4 1934713408
        %v1377 = vunpack.c.0.s8 %v1376
        %v1378 = vperm.slane %v1370, %v1377
        %v1379 = vrot.slane %v1342, 4
        %v1380 = vsel %vm467, %v1379, %v1330
        %v1381 = vrot.slane %v1330, 4
        %v1382 = vsel %vm467, %v1342, %v1381
        %v1384 = vunpack.c.l.s4 1934713408
        %v1385 = vunpack.c.0.s8 %v1384
        %v1386 = vperm.slane %v1380, %v1385
        %v1388 = vunpack.c.l.s4 1934713408
        %v1389 = vunpack.c.0.s8 %v1388
        %v1390 = vperm.slane %v1382, %v1389
        %v1391 = vrot.slane %v1374, 4
        %v1392 = vsel %vm467, %v1391, %v1350
        %v1393 = vrot.slane %v1350, 4
        %v1394 = vsel %vm467, %v1374, %v1393
        %v1395 = vrot.slane %v1378, 4
        %v1396 = vsel %vm467, %v1395, %v1354
        %v1397 = vrot.slane %v1354, 4
        %v1398 = vsel %vm467, %v1378, %v1397
        %v1399 = vrot.slane %v1386, 4
        %v1400 = vsel %vm467, %v1399, %v1362
        %v1401 = vrot.slane %v1362, 4
        %v1402 = vsel %vm467, %v1386, %v1401
        %v1403 = vrot.slane %v1390, 4
        %v1404 = vsel %vm467, %v1403, %v1366
        %v1405 = vrot.slane %v1366, 4
        %v1406 = vsel %vm467, %v1390, %v1405
        %1409 = vrot.lane.b32.xlu0 %v415, 112
        %v1410 = vpop.permute.xlu0 %1409
        %1411 = vrot.lane.b32.xlu0 %v418, 112
        %v1412 = vpop.permute.xlu0 %1411
        %1415 = vrot.lane.b32.xlu0 %v415, 96
        %v1416 = vpop.permute.xlu0 %1415
        %1417 = vrot.lane.b32.xlu0 %v418, 96
        %v1418 = vpop.permute.xlu0 %1417
        %1421 = vrot.lane.b32.xlu0 %v415, 80
        %v1422 = vpop.permute.xlu0 %1421
        %1423 = vrot.lane.b32.xlu0 %v418, 80
        %v1424 = vpop.permute.xlu0 %1423
        %1427 = vrot.lane.b32.xlu0 %v415, 64
        %v1428 = vpop.permute.xlu0 %1427
        %1429 = vrot.lane.b32.xlu0 %v418, 64
        %v1430 = vpop.permute.xlu0 %1429
        %1433 = vrot.lane.b32.xlu0 %v415, 48
        %v1434 = vpop.permute.xlu0 %1433
        %1435 = vrot.lane.b32.xlu0 %v418, 48
        %v1436 = vpop.permute.xlu0 %1435
        %1439 = vrot.lane.b32.xlu0 %v415, 32
        %v1440 = vpop.permute.xlu0 %1439
        %1441 = vrot.lane.b32.xlu0 %v418, 32
        %v1442 = vpop.permute.xlu0 %1441
        %1445 = vrot.lane.b32.xlu0 %v415, 16
        %v1446 = vpop.permute.xlu0 %1445
        %1447 = vrot.lane.b32.xlu0 %v418, 16
        %v1448 = vpop.permute.xlu0 %1447
        %v1451 = vrot.slane %v1416, 4
        %v1452 = vsel %vm467, %v1451, %v415
        %v1453 = vrot.slane %v415, 4
        %v1454 = vsel %vm467, %v1416, %v1453
        %v1456 = vunpack.c.l.s4 1983009808
        %v1457 = vunpack.c.0.s8 %v1456
        %v1458 = vperm.slane %v1452, %v1457
        %v1460 = vunpack.c.l.s4 1983009808
        %v1461 = vunpack.c.0.s8 %v1460
        %v1462 = vperm.slane %v1454, %v1461
        %v1463 = vrot.slane %v1422, 4
        %v1464 = vsel %vm467, %v1463, %v1410
        %v1465 = vrot.slane %v1410, 4
        %v1466 = vsel %vm467, %v1422, %v1465
        %v1468 = vunpack.c.l.s4 1983009808
        %v1469 = vunpack.c.0.s8 %v1468
        %v1470 = vperm.slane %v1464, %v1469
        %v1472 = vunpack.c.l.s4 1983009808
        %v1473 = vunpack.c.0.s8 %v1472
        %v1474 = vperm.slane %v1466, %v1473
        %v1475 = vrot.slane %v1440, 4
        %v1476 = vsel %vm467, %v1475, %v1428
        %v1477 = vrot.slane %v1428, 4
        %v1478 = vsel %vm467, %v1440, %v1477
        %v1480 = vunpack.c.l.s4 1983009808
        %v1481 = vunpack.c.0.s8 %v1480
        %v1482 = vperm.slane %v1476, %v1481
        %v1484 = vunpack.c.l.s4 1983009808
        %v1485 = vunpack.c.0.s8 %v1484
        %v1486 = vperm.slane %v1478, %v1485
        %v1487 = vrot.slane %v1446, 4
        %v1488 = vsel %vm467, %v1487, %v1434
        %v1489 = vrot.slane %v1434, 4
        %v1490 = vsel %vm467, %v1446, %v1489
        %v1492 = vunpack.c.l.s4 1983009808
        %v1493 = vunpack.c.0.s8 %v1492
        %v1494 = vperm.slane %v1488, %v1493
        %v1496 = vunpack.c.l.s4 1983009808
        %v1497 = vunpack.c.0.s8 %v1496
        %v1498 = vperm.slane %v1490, %v1497
        %v1499 = vrot.slane %v1470, 4
        %v1500 = vsel %vm467, %v1499, %v1458
        %v1501 = vrot.slane %v1458, 4
        %v1502 = vsel %vm467, %v1470, %v1501
        %v1504 = vunpack.c.l.s4 1934713408
        %v1505 = vunpack.c.0.s8 %v1504
        %v1506 = vperm.slane %v1500, %v1505
        %v1508 = vunpack.c.l.s4 1934713408
        %v1509 = vunpack.c.0.s8 %v1508
        %v1510 = vperm.slane %v1502, %v1509
        %v1511 = vrot.slane %v1474, 4
        %v1512 = vsel %vm467, %v1511, %v1462
        %v1513 = vrot.slane %v1462, 4
        %v1514 = vsel %vm467, %v1474, %v1513
        %v1516 = vunpack.c.l.s4 1934713408
        %v1517 = vunpack.c.0.s8 %v1516
        %v1518 = vperm.slane %v1512, %v1517
        %v1520 = vunpack.c.l.s4 1934713408
        %v1521 = vunpack.c.0.s8 %v1520
        %v1522 = vperm.slane %v1514, %v1521
        %v1523 = vrot.slane %v1494, 4
        %v1524 = vsel %vm467, %v1523, %v1482
        %v1525 = vrot.slane %v1482, 4
        %v1526 = vsel %vm467, %v1494, %v1525
        %v1528 = vunpack.c.l.s4 1934713408
        %v1529 = vunpack.c.0.s8 %v1528
        %v1530 = vperm.slane %v1524, %v1529
        %v1532 = vunpack.c.l.s4 1934713408
        %v1533 = vunpack.c.0.s8 %v1532
        %v1534 = vperm.slane %v1526, %v1533
        %v1535 = vrot.slane %v1498, 4
        %v1536 = vsel %vm467, %v1535, %v1486
        %v1537 = vrot.slane %v1486, 4
        %v1538 = vsel %vm467, %v1498, %v1537
        %v1540 = vunpack.c.l.s4 1934713408
        %v1541 = vunpack.c.0.s8 %v1540
        %v1542 = vperm.slane %v1536, %v1541
        %v1544 = vunpack.c.l.s4 1934713408
        %v1545 = vunpack.c.0.s8 %v1544
        %v1546 = vperm.slane %v1538, %v1545
        %v1547 = vrot.slane %v1530, 4
        %v1548 = vsel %vm467, %v1547, %v1506
        %v1549 = vrot.slane %v1506, 4
        %v1550 = vsel %vm467, %v1530, %v1549
        %v1551 = vrot.slane %v1534, 4
        %v1552 = vsel %vm467, %v1551, %v1510
        %v1553 = vrot.slane %v1510, 4
        %v1554 = vsel %vm467, %v1534, %v1553
        %v1555 = vrot.slane %v1542, 4
        %v1556 = vsel %vm467, %v1555, %v1518
        %v1557 = vrot.slane %v1518, 4
        %v1558 = vsel %vm467, %v1542, %v1557
        %v1559 = vrot.slane %v1546, 4
        %v1560 = vsel %vm467, %v1559, %v1522
        %v1561 = vrot.slane %v1522, 4
        %v1562 = vsel %vm467, %v1546, %v1561
        %v1563 = vrot.slane %v1418, 4
        %v1564 = vsel %vm467, %v1563, %v418
        %v1565 = vrot.slane %v418, 4
        %v1566 = vsel %vm467, %v1418, %v1565
        %v1568 = vunpack.c.l.s4 1983009808
        %v1569 = vunpack.c.0.s8 %v1568
        %v1570 = vperm.slane %v1564, %v1569
        %v1572 = vunpack.c.l.s4 1983009808
        %v1573 = vunpack.c.0.s8 %v1572
        %v1574 = vperm.slane %v1566, %v1573
        %v1575 = vrot.slane %v1424, 4
        %v1576 = vsel %vm467, %v1575, %v1412
        %v1577 = vrot.slane %v1412, 4
        %v1578 = vsel %vm467, %v1424, %v1577
        %v1580 = vunpack.c.l.s4 1983009808
        %v1581 = vunpack.c.0.s8 %v1580
        %v1582 = vperm.slane %v1576, %v1581
        %v1584 = vunpack.c.l.s4 1983009808
        %v1585 = vunpack.c.0.s8 %v1584
        %v1586 = vperm.slane %v1578, %v1585
        %v1587 = vrot.slane %v1442, 4
        %v1588 = vsel %vm467, %v1587, %v1430
        %v1589 = vrot.slane %v1430, 4
        %v1590 = vsel %vm467, %v1442, %v1589
        %v1592 = vunpack.c.l.s4 1983009808
        %v1593 = vunpack.c.0.s8 %v1592
        %v1594 = vperm.slane %v1588, %v1593
        %v1596 = vunpack.c.l.s4 1983009808
        %v1597 = vunpack.c.0.s8 %v1596
        %v1598 = vperm.slane %v1590, %v1597
        %v1599 = vrot.slane %v1448, 4
        %v1600 = vsel %vm467, %v1599, %v1436
        %v1601 = vrot.slane %v1436, 4
        %v1602 = vsel %vm467, %v1448, %v1601
        %v1604 = vunpack.c.l.s4 1983009808
        %v1605 = vunpack.c.0.s8 %v1604
        %v1606 = vperm.slane %v1600, %v1605
        %v1608 = vunpack.c.l.s4 1983009808
        %v1609 = vunpack.c.0.s8 %v1608
        %v1610 = vperm.slane %v1602, %v1609
        %v1611 = vrot.slane %v1582, 4
        %v1612 = vsel %vm467, %v1611, %v1570
        %v1613 = vrot.slane %v1570, 4
        %v1614 = vsel %vm467, %v1582, %v1613
        %v1616 = vunpack.c.l.s4 1934713408
        %v1617 = vunpack.c.0.s8 %v1616
        %v1618 = vperm.slane %v1612, %v1617
        %v1620 = vunpack.c.l.s4 1934713408
        %v1621 = vunpack.c.0.s8 %v1620
        %v1622 = vperm.slane %v1614, %v1621
        %v1623 = vrot.slane %v1586, 4
        %v1624 = vsel %vm467, %v1623, %v1574
        %v1625 = vrot.slane %v1574, 4
        %v1626 = vsel %vm467, %v1586, %v1625
        %v1628 = vunpack.c.l.s4 1934713408
        %v1629 = vunpack.c.0.s8 %v1628
        %v1630 = vperm.slane %v1624, %v1629
        %v1632 = vunpack.c.l.s4 1934713408
        %v1633 = vunpack.c.0.s8 %v1632
        %v1634 = vperm.slane %v1626, %v1633
        %v1635 = vrot.slane %v1606, 4
        %v1636 = vsel %vm467, %v1635, %v1594
        %v1637 = vrot.slane %v1594, 4
        %v1638 = vsel %vm467, %v1606, %v1637
        %v1640 = vunpack.c.l.s4 1934713408
        %v1641 = vunpack.c.0.s8 %v1640
        %v1642 = vperm.slane %v1636, %v1641
        %v1644 = vunpack.c.l.s4 1934713408
        %v1645 = vunpack.c.0.s8 %v1644
        %v1646 = vperm.slane %v1638, %v1645
        %v1647 = vrot.slane %v1610, 4
        %v1648 = vsel %vm467, %v1647, %v1598
        %v1649 = vrot.slane %v1598, 4
        %v1650 = vsel %vm467, %v1610, %v1649
        %v1652 = vunpack.c.l.s4 1934713408
        %v1653 = vunpack.c.0.s8 %v1652
        %v1654 = vperm.slane %v1648, %v1653
        %v1656 = vunpack.c.l.s4 1934713408
        %v1657 = vunpack.c.0.s8 %v1656
        %v1658 = vperm.slane %v1650, %v1657
        %v1659 = vrot.slane %v1642, 4
        %v1660 = vsel %vm467, %v1659, %v1618
        %v1661 = vrot.slane %v1618, 4
        %v1662 = vsel %vm467, %v1642, %v1661
        %v1663 = vrot.slane %v1646, 4
        %v1664 = vsel %vm467, %v1663, %v1622
        %v1665 = vrot.slane %v1622, 4
        %v1666 = vsel %vm467, %v1646, %v1665
        %v1667 = vrot.slane %v1654, 4
        %v1668 = vsel %vm467, %v1667, %v1630
        %v1669 = vrot.slane %v1630, 4
        %v1670 = vsel %vm467, %v1654, %v1669
        %v1671 = vrot.slane %v1658, 4
        %v1672 = vsel %vm467, %v1671, %v1634
        %v1673 = vrot.slane %v1634, 4
        %v1674 = vsel %vm467, %v1658, %v1673
        %v1675 = vrot.slane %v1552, 4
        %v1676 = vsel %vm467, %v1675, %v1548
        %v1677 = vrot.slane %v1548, 4
        %v1678 = vsel %vm467, %v1552, %v1677
        %v1680 = vunpack.c.l.s4 1983009808
        %v1681 = vunpack.c.0.s8 %v1680
        %v1682 = vperm.slane %v1676, %v1681
        %v1684 = vunpack.c.l.s4 1983009808
        %v1685 = vunpack.c.0.s8 %v1684
        %v1686 = vperm.slane %v1678, %v1685
        %v1687 = vrot.slane %v1554, 4
        %v1688 = vsel %vm467, %v1687, %v1550
        %v1689 = vrot.slane %v1550, 4
        %v1690 = vsel %vm467, %v1554, %v1689
        %v1692 = vunpack.c.l.s4 1983009808
        %v1693 = vunpack.c.0.s8 %v1692
        %v1694 = vperm.slane %v1688, %v1693
        %v1696 = vunpack.c.l.s4 1983009808
        %v1697 = vunpack.c.0.s8 %v1696
        %v1698 = vperm.slane %v1690, %v1697
        %v1699 = vrot.slane %v1560, 4
        %v1700 = vsel %vm467, %v1699, %v1556
        %v1701 = vrot.slane %v1556, 4
        %v1702 = vsel %vm467, %v1560, %v1701
        %v1704 = vunpack.c.l.s4 1983009808
        %v1705 = vunpack.c.0.s8 %v1704
        %v1706 = vperm.slane %v1700, %v1705
        %v1708 = vunpack.c.l.s4 1983009808
        %v1709 = vunpack.c.0.s8 %v1708
        %v1710 = vperm.slane %v1702, %v1709
        %v1711 = vrot.slane %v1562, 4
        %v1712 = vsel %vm467, %v1711, %v1558
        %v1713 = vrot.slane %v1558, 4
        %v1714 = vsel %vm467, %v1562, %v1713
        %v1716 = vunpack.c.l.s4 1983009808
        %v1717 = vunpack.c.0.s8 %v1716
        %v1718 = vperm.slane %v1712, %v1717
        %v1720 = vunpack.c.l.s4 1983009808
        %v1721 = vunpack.c.0.s8 %v1720
        %v1722 = vperm.slane %v1714, %v1721
        %v1723 = vrot.slane %v1694, 4
        %v1724 = vsel %vm467, %v1723, %v1682
        %v1725 = vrot.slane %v1682, 4
        %v1726 = vsel %vm467, %v1694, %v1725
        %v1728 = vunpack.c.l.s4 1934713408
        %v1729 = vunpack.c.0.s8 %v1728
        %v1730 = vperm.slane %v1724, %v1729
        %v1732 = vunpack.c.l.s4 1934713408
        %v1733 = vunpack.c.0.s8 %v1732
        %v1734 = vperm.slane %v1726, %v1733
        %v1735 = vrot.slane %v1698, 4
        %v1736 = vsel %vm467, %v1735, %v1686
        %v1737 = vrot.slane %v1686, 4
        %v1738 = vsel %vm467, %v1698, %v1737
        %v1740 = vunpack.c.l.s4 1934713408
        %v1741 = vunpack.c.0.s8 %v1740
        %v1742 = vperm.slane %v1736, %v1741
        %v1744 = vunpack.c.l.s4 1934713408
        %v1745 = vunpack.c.0.s8 %v1744
        %v1746 = vperm.slane %v1738, %v1745
        %v1747 = vrot.slane %v1718, 4
        %v1748 = vsel %vm467, %v1747, %v1706
        %v1749 = vrot.slane %v1706, 4
        %v1750 = vsel %vm467, %v1718, %v1749
        %v1752 = vunpack.c.l.s4 1934713408
        %v1753 = vunpack.c.0.s8 %v1752
        %v1754 = vperm.slane %v1748, %v1753
        %v1756 = vunpack.c.l.s4 1934713408
        %v1757 = vunpack.c.0.s8 %v1756
        %v1758 = vperm.slane %v1750, %v1757
        %v1759 = vrot.slane %v1722, 4
        %v1760 = vsel %vm467, %v1759, %v1710
        %v1761 = vrot.slane %v1710, 4
        %v1762 = vsel %vm467, %v1722, %v1761
        %v1764 = vunpack.c.l.s4 1934713408
        %v1765 = vunpack.c.0.s8 %v1764
        %v1766 = vperm.slane %v1760, %v1765
        %v1768 = vunpack.c.l.s4 1934713408
        %v1769 = vunpack.c.0.s8 %v1768
        %v1770 = vperm.slane %v1762, %v1769
        %v1771 = vrot.slane %v1754, 4
        %v1772 = vsel %vm467, %v1771, %v1730
        %v1773 = vrot.slane %v1730, 4
        %v1774 = vsel %vm467, %v1754, %v1773
        %v1775 = vrot.slane %v1758, 4
        %v1776 = vsel %vm467, %v1775, %v1734
        %v1777 = vrot.slane %v1734, 4
        %v1778 = vsel %vm467, %v1758, %v1777
        %v1779 = vrot.slane %v1766, 4
        %v1780 = vsel %vm467, %v1779, %v1742
        %v1781 = vrot.slane %v1742, 4
        %v1782 = vsel %vm467, %v1766, %v1781
        %v1783 = vrot.slane %v1770, 4
        %v1784 = vsel %vm467, %v1783, %v1746
        %v1785 = vrot.slane %v1746, 4
        %v1786 = vsel %vm467, %v1770, %v1785
        %v1787 = vrot.slane %v1664, 4
        %v1788 = vsel %vm467, %v1787, %v1660
        %v1789 = vrot.slane %v1660, 4
        %v1790 = vsel %vm467, %v1664, %v1789
        %v1792 = vunpack.c.l.s4 1983009808
        %v1793 = vunpack.c.0.s8 %v1792
        %v1794 = vperm.slane %v1788, %v1793
        %v1796 = vunpack.c.l.s4 1983009808
        %v1797 = vunpack.c.0.s8 %v1796
        %v1798 = vperm.slane %v1790, %v1797
        %v1799 = vrot.slane %v1666, 4
        %v1800 = vsel %vm467, %v1799, %v1662
        %v1801 = vrot.slane %v1662, 4
        %v1802 = vsel %vm467, %v1666, %v1801
        %v1804 = vunpack.c.l.s4 1983009808
        %v1805 = vunpack.c.0.s8 %v1804
        %v1806 = vperm.slane %v1800, %v1805
        %v1808 = vunpack.c.l.s4 1983009808
        %v1809 = vunpack.c.0.s8 %v1808
        %v1810 = vperm.slane %v1802, %v1809
        %v1811 = vrot.slane %v1672, 4
        %v1812 = vsel %vm467, %v1811, %v1668
        %v1813 = vrot.slane %v1668, 4
        %v1814 = vsel %vm467, %v1672, %v1813
        %v1816 = vunpack.c.l.s4 1983009808
        %v1817 = vunpack.c.0.s8 %v1816
        %v1818 = vperm.slane %v1812, %v1817
        %v1820 = vunpack.c.l.s4 1983009808
        %v1821 = vunpack.c.0.s8 %v1820
        %v1822 = vperm.slane %v1814, %v1821
        %v1823 = vrot.slane %v1674, 4
        %v1824 = vsel %vm467, %v1823, %v1670
        %v1825 = vrot.slane %v1670, 4
        %v1826 = vsel %vm467, %v1674, %v1825
        %v1828 = vunpack.c.l.s4 1983009808
        %v1829 = vunpack.c.0.s8 %v1828
        %v1830 = vperm.slane %v1824, %v1829
        %v1832 = vunpack.c.l.s4 1983009808
        %v1833 = vunpack.c.0.s8 %v1832
        %v1834 = vperm.slane %v1826, %v1833
        %v1835 = vrot.slane %v1806, 4
        %v1836 = vsel %vm467, %v1835, %v1794
        %v1837 = vrot.slane %v1794, 4
        %v1838 = vsel %vm467, %v1806, %v1837
        %v1840 = vunpack.c.l.s4 1934713408
        %v1841 = vunpack.c.0.s8 %v1840
        %v1842 = vperm.slane %v1836, %v1841
        %v1844 = vunpack.c.l.s4 1934713408
        %v1845 = vunpack.c.0.s8 %v1844
        %v1846 = vperm.slane %v1838, %v1845
        %v1847 = vrot.slane %v1810, 4
        %v1848 = vsel %vm467, %v1847, %v1798
        %v1849 = vrot.slane %v1798, 4
        %v1850 = vsel %vm467, %v1810, %v1849
        %v1852 = vunpack.c.l.s4 1934713408
        %v1853 = vunpack.c.0.s8 %v1852
        %v1854 = vperm.slane %v1848, %v1853
        %v1856 = vunpack.c.l.s4 1934713408
        %v1857 = vunpack.c.0.s8 %v1856
        %v1858 = vperm.slane %v1850, %v1857
        %v1859 = vrot.slane %v1830, 4
        %v1860 = vsel %vm467, %v1859, %v1818
        %v1861 = vrot.slane %v1818, 4
        %v1862 = vsel %vm467, %v1830, %v1861
        %v1864 = vunpack.c.l.s4 1934713408
        %v1865 = vunpack.c.0.s8 %v1864
        %v1866 = vperm.slane %v1860, %v1865
        %v1868 = vunpack.c.l.s4 1934713408
        %v1869 = vunpack.c.0.s8 %v1868
        %v1870 = vperm.slane %v1862, %v1869
        %v1871 = vrot.slane %v1834, 4
        %v1872 = vsel %vm467, %v1871, %v1822
        %v1873 = vrot.slane %v1822, 4
        %v1874 = vsel %vm467, %v1834, %v1873
        %v1876 = vunpack.c.l.s4 1934713408
        %v1877 = vunpack.c.0.s8 %v1876
        %v1878 = vperm.slane %v1872, %v1877
        %v1880 = vunpack.c.l.s4 1934713408
        %v1881 = vunpack.c.0.s8 %v1880
        %v1882 = vperm.slane %v1874, %v1881
        %v1883 = vrot.slane %v1866, 4
        %v1884 = vsel %vm467, %v1883, %v1842
        %v1885 = vrot.slane %v1842, 4
        %v1886 = vsel %vm467, %v1866, %v1885
        %v1887 = vrot.slane %v1870, 4
        %v1888 = vsel %vm467, %v1887, %v1846
        %v1889 = vrot.slane %v1846, 4
        %v1890 = vsel %vm467, %v1870, %v1889
        %v1891 = vrot.slane %v1878, 4
        %v1892 = vsel %vm467, %v1891, %v1854
        %v1893 = vrot.slane %v1854, 4
        %v1894 = vsel %vm467, %v1878, %v1893
        %v1895 = vrot.slane %v1882, 4
        %v1896 = vsel %vm467, %v1895, %v1858
        %v1897 = vrot.slane %v1858, 4
        %v1898 = vsel %vm467, %v1882, %v1897
        %vm1899 = vcmask 130048
        %v1901 = vsel %vm1899, %v788, 0
        %v1904 = vsel %vm1899, %v900, 0
        %v1907 = vsel %vm1899, %v1280, 0
        %v1910 = vsel %vm1899, %v1392, 0
        %1912 = vmatpush.xpose.msra.mxu0 0.0
        %1913 = vmatpush.xpose.msra.mxu0 0.0
        %1914 = vmatpush.xpose.msra.mxu0 0.0
        %1915 = vmatpush.xpose.msra.mxu0 0.0
        %1916 = vmatpush.xpose.msra.mxu0 0.0
        %1917 = vmatpush.xpose.msra.mxu0 0.0
        %1918 = vmatpush.xpose.msra.mxu0 0.0
        %1919 = vmatpush.xpose.msra.mxu0 0.0
        %1920 = vmatpush.xpose.msra.mxu0 0.0
        %1921 = vmatpush.xpose.msra.mxu0 0.0
        %1922 = vmatpush.xpose.msra.mxu0 0.0
        %1923 = vmatpush.xpose.msra.mxu0 0.0
        %1924 = vmatpush.xpose.msra.mxu0 0.0
        %1925 = vmatpush.xpose.msra.mxu0 0.0
        %1926 = vmatpush.xpose.msra.mxu0 %v1910
        %1927 = vmatpush.xpose.msra.mxu0 %v1907
        %1928 = vmatmul.f32.gmra.mxu0 %v1901
        %v1929 = vpop.f32.mrf.mxu0
        %v1930 = vadd.f32 0.0, %v1929
        %1931 = vmatmul.f32.gmra.mxu0 %v1904
        %v1932 = vpop.f32.mrf.mxu0
        %v1933 = vadd.f32 0.0, %v1932
        %1934 = vdwg.mxu0
        %v1936 = vsel %vm1899, %v790, 0
        %v1939 = vsel %vm1899, %v902, 0
        %v1942 = vsel %vm1899, %v1282, 0
        %v1945 = vsel %vm1899, %v1394, 0
        %1947 = vmatpush.xpose.msra.mxu0 0.0
        %1948 = vmatpush.xpose.msra.mxu0 0.0
        %1949 = vmatpush.xpose.msra.mxu0 0.0
        %1950 = vmatpush.xpose.msra.mxu0 0.0
        %1951 = vmatpush.xpose.msra.mxu0 0.0
        %1952 = vmatpush.xpose.msra.mxu0 0.0
        %1953 = vmatpush.xpose.msra.mxu0 0.0
        %1954 = vmatpush.xpose.msra.mxu0 0.0
        %1955 = vmatpush.xpose.msra.mxu0 0.0
        %1956 = vmatpush.xpose.msra.mxu0 0.0
        %1957 = vmatpush.xpose.msra.mxu0 0.0
        %1958 = vmatpush.xpose.msra.mxu0 0.0
        %1959 = vmatpush.xpose.msra.mxu0 0.0
        %1960 = vmatpush.xpose.msra.mxu0 0.0
        %1961 = vmatpush.xpose.msra.mxu0 %v1945
        %1962 = vmatpush.xpose.msra.mxu0 %v1942
        %1963 = vmatmul.f32.gmra.mxu0 %v1936
        %v1964 = vpop.f32.mrf.mxu0
        %v1965 = vadd.f32 0.0, %v1964
        %1966 = vmatmul.f32.gmra.mxu0 %v1939
        %v1967 = vpop.f32.mrf.mxu0
        %v1968 = vadd.f32 0.0, %v1967
        %1969 = vdwg.mxu0
        %v1971 = vsel %vm1899, %v792, 0
        %v1974 = vsel %vm1899, %v904, 0
        %v1977 = vsel %vm1899, %v1284, 0
        %v1980 = vsel %vm1899, %v1396, 0
        %1982 = vmatpush.xpose.msra.mxu0 0.0
        %1983 = vmatpush.xpose.msra.mxu0 0.0
        %1984 = vmatpush.xpose.msra.mxu0 0.0
        %1985 = vmatpush.xpose.msra.mxu0 0.0
        %1986 = vmatpush.xpose.msra.mxu0 0.0
        %1987 = vmatpush.xpose.msra.mxu0 0.0
        %1988 = vmatpush.xpose.msra.mxu0 0.0
        %1989 = vmatpush.xpose.msra.mxu0 0.0
        %1990 = vmatpush.xpose.msra.mxu0 0.0
        %1991 = vmatpush.xpose.msra.mxu0 0.0
        %1992 = vmatpush.xpose.msra.mxu0 0.0
        %1993 = vmatpush.xpose.msra.mxu0 0.0
        %1994 = vmatpush.xpose.msra.mxu0 0.0
        %1995 = vmatpush.xpose.msra.mxu0 0.0
        %1996 = vmatpush.xpose.msra.mxu0 %v1980
        %1997 = vmatpush.xpose.msra.mxu0 %v1977
        %1998 = vmatmul.f32.gmra.mxu0 %v1971
        %v1999 = vpop.f32.mrf.mxu0
        %v2000 = vadd.f32 0.0, %v1999
        %2001 = vmatmul.f32.gmra.mxu0 %v1974
        %v2002 = vpop.f32.mrf.mxu0
        %v2003 = vadd.f32 0.0, %v2002
        %2004 = vdwg.mxu0
        %v2006 = vsel %vm1899, %v794, 0
        %v2009 = vsel %vm1899, %v906, 0
        %v2012 = vsel %vm1899, %v1286, 0
        %v2015 = vsel %vm1899, %v1398, 0
        %2017 = vmatpush.xpose.msra.mxu0 0.0
        %2018 = vmatpush.xpose.msra.mxu0 0.0
        %2019 = vmatpush.xpose.msra.mxu0 0.0
        %2020 = vmatpush.xpose.msra.mxu0 0.0
        %2021 = vmatpush.xpose.msra.mxu0 0.0
        %2022 = vmatpush.xpose.msra.mxu0 0.0
        %2023 = vmatpush.xpose.msra.mxu0 0.0
        %2024 = vmatpush.xpose.msra.mxu0 0.0
        %2025 = vmatpush.xpose.msra.mxu0 0.0
        %2026 = vmatpush.xpose.msra.mxu0 0.0
        %2027 = vmatpush.xpose.msra.mxu0 0.0
        %2028 = vmatpush.xpose.msra.mxu0 0.0
        %2029 = vmatpush.xpose.msra.mxu0 0.0
        %2030 = vmatpush.xpose.msra.mxu0 0.0
        %2031 = vmatpush.xpose.msra.mxu0 %v2015
        %2032 = vmatpush.xpose.msra.mxu0 %v2012
        %2033 = vmatmul.f32.gmra.mxu0 %v2006
        %v2034 = vpop.f32.mrf.mxu0
        %v2035 = vadd.f32 0.0, %v2034
        %2036 = vmatmul.f32.gmra.mxu0 %v2009
        %v2037 = vpop.f32.mrf.mxu0
        %v2038 = vadd.f32 0.0, %v2037
        %2039 = vdwg.mxu0
        %v2041 = vsel %vm1899, %v796, 0
        %v2044 = vsel %vm1899, %v908, 0
        %v2047 = vsel %vm1899, %v1288, 0
        %v2050 = vsel %vm1899, %v1400, 0
        %2052 = vmatpush.xpose.msra.mxu0 0.0
        %2053 = vmatpush.xpose.msra.mxu0 0.0
        %2054 = vmatpush.xpose.msra.mxu0 0.0
        %2055 = vmatpush.xpose.msra.mxu0 0.0
        %2056 = vmatpush.xpose.msra.mxu0 0.0
        %2057 = vmatpush.xpose.msra.mxu0 0.0
        %2058 = vmatpush.xpose.msra.mxu0 0.0
        %2059 = vmatpush.xpose.msra.mxu0 0.0
        %2060 = vmatpush.xpose.msra.mxu0 0.0
        %2061 = vmatpush.xpose.msra.mxu0 0.0
        %2062 = vmatpush.xpose.msra.mxu0 0.0
        %2063 = vmatpush.xpose.msra.mxu0 0.0
        %2064 = vmatpush.xpose.msra.mxu0 0.0
        %2065 = vmatpush.xpose.msra.mxu0 0.0
        %2066 = vmatpush.xpose.msra.mxu0 %v2050
        %2067 = vmatpush.xpose.msra.mxu0 %v2047
        %2068 = vmatmul.f32.gmra.mxu0 %v2041
        %v2069 = vpop.f32.mrf.mxu0
        %v2070 = vadd.f32 0.0, %v2069
        %2071 = vmatmul.f32.gmra.mxu0 %v2044
        %v2072 = vpop.f32.mrf.mxu0
        %v2073 = vadd.f32 0.0, %v2072
        %2074 = vdwg.mxu0
        %v2076 = vsel %vm1899, %v798, 0
        %v2079 = vsel %vm1899, %v910, 0
        %v2082 = vsel %vm1899, %v1290, 0
        %v2085 = vsel %vm1899, %v1402, 0
        %2087 = vmatpush.xpose.msra.mxu0 0.0
        %2088 = vmatpush.xpose.msra.mxu0 0.0
        %2089 = vmatpush.xpose.msra.mxu0 0.0
        %2090 = vmatpush.xpose.msra.mxu0 0.0
        %2091 = vmatpush.xpose.msra.mxu0 0.0
        %2092 = vmatpush.xpose.msra.mxu0 0.0
        %2093 = vmatpush.xpose.msra.mxu0 0.0
        %2094 = vmatpush.xpose.msra.mxu0 0.0
        %2095 = vmatpush.xpose.msra.mxu0 0.0
        %2096 = vmatpush.xpose.msra.mxu0 0.0
        %2097 = vmatpush.xpose.msra.mxu0 0.0
        %2098 = vmatpush.xpose.msra.mxu0 0.0
        %2099 = vmatpush.xpose.msra.mxu0 0.0
        %2100 = vmatpush.xpose.msra.mxu0 0.0
        %2101 = vmatpush.xpose.msra.mxu0 %v2085
        %2102 = vmatpush.xpose.msra.mxu0 %v2082
        %2103 = vmatmul.f32.gmra.mxu0 %v2076
        %v2104 = vpop.f32.mrf.mxu0
        %v2105 = vadd.f32 0.0, %v2104
        %2106 = vmatmul.f32.gmra.mxu0 %v2079
        %v2107 = vpop.f32.mrf.mxu0
        %v2108 = vadd.f32 0.0, %v2107
        %2109 = vdwg.mxu0
        %v2111 = vsel %vm1899, %v800, 0
        %v2114 = vsel %vm1899, %v912, 0
        %v2117 = vsel %vm1899, %v1292, 0
        %v2120 = vsel %vm1899, %v1404, 0
        %2122 = vmatpush.xpose.msra.mxu0 0.0
        %2123 = vmatpush.xpose.msra.mxu0 0.0
        %2124 = vmatpush.xpose.msra.mxu0 0.0
        %2125 = vmatpush.xpose.msra.mxu0 0.0
        %2126 = vmatpush.xpose.msra.mxu0 0.0
        %2127 = vmatpush.xpose.msra.mxu0 0.0
        %2128 = vmatpush.xpose.msra.mxu0 0.0
        %2129 = vmatpush.xpose.msra.mxu0 0.0
        %2130 = vmatpush.xpose.msra.mxu0 0.0
        %2131 = vmatpush.xpose.msra.mxu0 0.0
        %2132 = vmatpush.xpose.msra.mxu0 0.0
        %2133 = vmatpush.xpose.msra.mxu0 0.0
        %2134 = vmatpush.xpose.msra.mxu0 0.0
        %2135 = vmatpush.xpose.msra.mxu0 0.0
        %2136 = vmatpush.xpose.msra.mxu0 %v2120
        %2137 = vmatpush.xpose.msra.mxu0 %v2117
        %2138 = vmatmul.f32.gmra.mxu0 %v2111
        %v2139 = vpop.f32.mrf.mxu0
        %v2140 = vadd.f32 0.0, %v2139
        %2141 = vmatmul.f32.gmra.mxu0 %v2114
        %v2142 = vpop.f32.mrf.mxu0
        %v2143 = vadd.f32 0.0, %v2142
        %2144 = vdwg.mxu0
        %v2146 = vsel %vm1899, %v802, 0
        %v2149 = vsel %vm1899, %v914, 0
        %v2152 = vsel %vm1899, %v1294, 0
        %v2155 = vsel %vm1899, %v1406, 0
        %2157 = vmatpush.xpose.msra.mxu0 0.0
        %2158 = vmatpush.xpose.msra.mxu0 0.0
        %2159 = vmatpush.xpose.msra.mxu0 0.0
        %2160 = vmatpush.xpose.msra.mxu0 0.0
        %2161 = vmatpush.xpose.msra.mxu0 0.0
        %2162 = vmatpush.xpose.msra.mxu0 0.0
        %2163 = vmatpush.xpose.msra.mxu0 0.0
        %2164 = vmatpush.xpose.msra.mxu0 0.0
        %2165 = vmatpush.xpose.msra.mxu0 0.0
        %2166 = vmatpush.xpose.msra.mxu0 0.0
        %2167 = vmatpush.xpose.msra.mxu0 0.0
        %2168 = vmatpush.xpose.msra.mxu0 0.0
        %2169 = vmatpush.xpose.msra.mxu0 0.0
        %2170 = vmatpush.xpose.msra.mxu0 0.0
        %2171 = vmatpush.xpose.msra.mxu0 %v2155
        %2172 = vmatpush.xpose.msra.mxu0 %v2152
        %2173 = vmatmul.f32.gmra.mxu0 %v2146
        %v2174 = vpop.f32.mrf.mxu0
        %v2175 = vadd.f32 0.0, %v2174
        %2176 = vmatmul.f32.gmra.mxu0 %v2149
        %v2177 = vpop.f32.mrf.mxu0
        %v2178 = vadd.f32 0.0, %v2177
        %2179 = vdwg.mxu0
        %v2180 = vsel %vm1899, %v1930, -inf
        %2181 = vmax.xlane.f32.xlu0 %v2180
        %v2182 = vpop.xlane.xlu0 %2181
        %v2183 = vsel %vm1899, %v1933, -inf
        %2184 = vmax.xlane.f32.xlu0 %v2183
        %v2185 = vpop.xlane.xlu0 %2184
        %v2186 = vsel %vm1899, %v1965, -inf
        %2187 = vmax.xlane.f32.xlu0 %v2186
        %v2188 = vpop.xlane.xlu0 %2187
        %v2189 = vsel %vm1899, %v1968, -inf
        %2190 = vmax.xlane.f32.xlu0 %v2189
        %v2191 = vpop.xlane.xlu0 %2190
        %v2192 = vsel %vm1899, %v2000, -inf
        %2193 = vmax.xlane.f32.xlu0 %v2192
        %v2194 = vpop.xlane.xlu0 %2193
        %v2195 = vsel %vm1899, %v2003, -inf
        %2196 = vmax.xlane.f32.xlu0 %v2195
        %v2197 = vpop.xlane.xlu0 %2196
        %v2198 = vsel %vm1899, %v2035, -inf
        %2199 = vmax.xlane.f32.xlu0 %v2198
        %v2200 = vpop.xlane.xlu0 %2199
        %v2201 = vsel %vm1899, %v2038, -inf
        %2202 = vmax.xlane.f32.xlu0 %v2201
        %v2203 = vpop.xlane.xlu0 %2202
        %v2204 = vsel %vm1899, %v2070, -inf
        %2205 = vmax.xlane.f32.xlu0 %v2204
        %v2206 = vpop.xlane.xlu0 %2205
        %v2207 = vsel %vm1899, %v2073, -inf
        %2208 = vmax.xlane.f32.xlu0 %v2207
        %v2209 = vpop.xlane.xlu0 %2208
        %v2210 = vsel %vm1899, %v2105, -inf
        %2211 = vmax.xlane.f32.xlu0 %v2210
        %v2212 = vpop.xlane.xlu0 %2211
        %v2213 = vsel %vm1899, %v2108, -inf
        %2214 = vmax.xlane.f32.xlu0 %v2213
        %v2215 = vpop.xlane.xlu0 %2214
        %v2216 = vsel %vm1899, %v2140, -inf
        %2217 = vmax.xlane.f32.xlu0 %v2216
        %v2218 = vpop.xlane.xlu0 %2217
        %v2219 = vsel %vm1899, %v2143, -inf
        %2220 = vmax.xlane.f32.xlu0 %v2219
        %v2221 = vpop.xlane.xlu0 %2220
        %v2222 = vsel %vm1899, %v2175, -inf
        %2223 = vmax.xlane.f32.xlu0 %v2222
        %v2224 = vpop.xlane.xlu0 %2223
        %v2225 = vsel %vm1899, %v2178, -inf
        %2226 = vmax.xlane.f32.xlu0 %v2225
        %v2227 = vpop.xlane.xlu0 %2226
        %v2228 = vsub.f32 %v1930, %v2182
        %v2229 = vsub.f32 %v1933, %v2185
        %v2230 = vsub.f32 %v1965, %v2188
        %v2231 = vsub.f32 %v1968, %v2191
        %v2232 = vsub.f32 %v2000, %v2194
        %v2233 = vsub.f32 %v2003, %v2197
        %v2234 = vsub.f32 %v2035, %v2200
        %v2235 = vsub.f32 %v2038, %v2203
        %v2236 = vsub.f32 %v2070, %v2206
        %v2237 = vsub.f32 %v2073, %v2209
        %v2238 = vsub.f32 %v2105, %v2212
        %v2239 = vsub.f32 %v2108, %v2215
        %v2240 = vsub.f32 %v2140, %v2218
        %v2241 = vsub.f32 %v2143, %v2221
        %v2242 = vsub.f32 %v2175, %v2224
        %v2243 = vsub.f32 %v2178, %v2227
        %v2244 = vmul.f32 %v2228, 1.442695
        %v2245 = vpow.pop %v2244
        %v2246 = vmul.f32 %v2229, 1.442695
        %v2247 = vpow.pop %v2246
        %v2248 = vmul.f32 %v2230, 1.442695
        %v2249 = vpow.pop %v2248
        %v2250 = vmul.f32 %v2231, 1.442695
        %v2251 = vpow.pop %v2250
        %v2252 = vmul.f32 %v2232, 1.442695
        %v2253 = vpow.pop %v2252
        %v2254 = vmul.f32 %v2233, 1.442695
        %v2255 = vpow.pop %v2254
        %v2256 = vmul.f32 %v2234, 1.442695
        %v2257 = vpow.pop %v2256
        %v2258 = vmul.f32 %v2235, 1.442695
        %v2259 = vpow.pop %v2258
        %v2260 = vmul.f32 %v2236, 1.442695
        %v2261 = vpow.pop %v2260
        %v2262 = vmul.f32 %v2237, 1.442695
        %v2263 = vpow.pop %v2262
        %v2264 = vmul.f32 %v2238, 1.442695
        %v2265 = vpow.pop %v2264
        %v2266 = vmul.f32 %v2239, 1.442695
        %v2267 = vpow.pop %v2266
        %v2268 = vmul.f32 %v2240, 1.442695
        %v2269 = vpow.pop %v2268
        %v2270 = vmul.f32 %v2241, 1.442695
        %v2271 = vpow.pop %v2270
        %v2272 = vmul.f32 %v2242, 1.442695
        %v2273 = vpow.pop %v2272
        %v2274 = vmul.f32 %v2243, 1.442695
        %v2275 = vpow.pop %v2274
        %v2276 = vsel %vm1899, %v2245, 0.0
        %2277 = vadd.xlane.f32.xlu0 %v2276
        %v2278 = vpop.xlane.xlu0 %2277
        %v2279 = vsel %vm1899, %v2247, 0.0
        %2280 = vadd.xlane.f32.xlu0 %v2279
        %v2281 = vpop.xlane.xlu0 %2280
        %v2282 = vsel %vm1899, %v2249, 0.0
        %2283 = vadd.xlane.f32.xlu0 %v2282
        %v2284 = vpop.xlane.xlu0 %2283
        %v2285 = vsel %vm1899, %v2251, 0.0
        %2286 = vadd.xlane.f32.xlu0 %v2285
        %v2287 = vpop.xlane.xlu0 %2286
        %v2288 = vsel %vm1899, %v2253, 0.0
        %2289 = vadd.xlane.f32.xlu0 %v2288
        %v2290 = vpop.xlane.xlu0 %2289
        %v2291 = vsel %vm1899, %v2255, 0.0
        %2292 = vadd.xlane.f32.xlu0 %v2291
        %v2293 = vpop.xlane.xlu0 %2292
        %v2294 = vsel %vm1899, %v2257, 0.0
        %2295 = vadd.xlane.f32.xlu0 %v2294
        %v2296 = vpop.xlane.xlu0 %2295
        %v2297 = vsel %vm1899, %v2259, 0.0
        %2298 = vadd.xlane.f32.xlu0 %v2297
        %v2299 = vpop.xlane.xlu0 %2298
        %v2300 = vsel %vm1899, %v2261, 0.0
        %2301 = vadd.xlane.f32.xlu0 %v2300
        %v2302 = vpop.xlane.xlu0 %2301
        %v2303 = vsel %vm1899, %v2263, 0.0
        %2304 = vadd.xlane.f32.xlu0 %v2303
        %v2305 = vpop.xlane.xlu0 %2304
        %v2306 = vsel %vm1899, %v2265, 0.0
        %2307 = vadd.xlane.f32.xlu0 %v2306
        %v2308 = vpop.xlane.xlu0 %2307
        %v2309 = vsel %vm1899, %v2267, 0.0
        %2310 = vadd.xlane.f32.xlu0 %v2309
        %v2311 = vpop.xlane.xlu0 %2310
        %v2312 = vsel %vm1899, %v2269, 0.0
        %2313 = vadd.xlane.f32.xlu0 %v2312
        %v2314 = vpop.xlane.xlu0 %2313
        %v2315 = vsel %vm1899, %v2271, 0.0
        %2316 = vadd.xlane.f32.xlu0 %v2315
        %v2317 = vpop.xlane.xlu0 %2316
        %v2318 = vsel %vm1899, %v2273, 0.0
        %2319 = vadd.xlane.f32.xlu0 %v2318
        %v2320 = vpop.xlane.xlu0 %2319
        %v2321 = vsel %vm1899, %v2275, 0.0
        %2322 = vadd.xlane.f32.xlu0 %v2321
        %v2323 = vpop.xlane.xlu0 %2322
        %v2325 = vsel %vm1899, %v2245, 0
        %v2328 = vsel %vm1899, %v2247, 0
        %2330 = vmatpush.msra.mxu0 0.0
        %2331 = vmatpush.msra.mxu0 0.0
        %2332 = vmatpush.msra.mxu0 0.0
        %2333 = vmatpush.msra.mxu0 0.0
        %2334 = vmatpush.msra.mxu0 0.0
        %2335 = vmatpush.msra.mxu0 0.0
        %2336 = vmatpush.msra.mxu0 0.0
        %2337 = vmatpush.msra.mxu0 0.0
        %2338 = vmatpush.msra.mxu0 0.0
        %2339 = vmatpush.msra.mxu0 0.0
        %2340 = vmatpush.msra.mxu0 0.0
        %2341 = vmatpush.msra.mxu0 0.0
        %2342 = vmatpush.msra.mxu0 0.0
        %2343 = vmatpush.msra.mxu0 0.0
        %2344 = vmatpush.msra.mxu0 %v1884
        %2345 = vmatpush.msra.mxu0 %v1772
        %2346 = vmatmul.f32.gmra.mxu0 %v2325
        %v2347 = vpop.f32.mrf.mxu0
        %v2348 = vadd.f32 0.0, %v2347
        %2349 = vmatmul.f32.gmra.mxu0 %v2328
        %v2350 = vpop.f32.mrf.mxu0
        %v2351 = vadd.f32 0.0, %v2350
        %2352 = vdwg.mxu0
        %v2354 = vsel %vm1899, %v2249, 0
        %v2357 = vsel %vm1899, %v2251, 0
        %2359 = vmatpush.msra.mxu0 0.0
        %2360 = vmatpush.msra.mxu0 0.0
        %2361 = vmatpush.msra.mxu0 0.0
        %2362 = vmatpush.msra.mxu0 0.0
        %2363 = vmatpush.msra.mxu0 0.0
        %2364 = vmatpush.msra.mxu0 0.0
        %2365 = vmatpush.msra.mxu0 0.0
        %2366 = vmatpush.msra.mxu0 0.0
        %2367 = vmatpush.msra.mxu0 0.0
        %2368 = vmatpush.msra.mxu0 0.0
        %2369 = vmatpush.msra.mxu0 0.0
        %2370 = vmatpush.msra.mxu0 0.0
        %2371 = vmatpush.msra.mxu0 0.0
        %2372 = vmatpush.msra.mxu0 0.0
        %2373 = vmatpush.msra.mxu0 %v1886
        %2374 = vmatpush.msra.mxu0 %v1774
        %2375 = vmatmul.f32.gmra.mxu0 %v2354
        %v2376 = vpop.f32.mrf.mxu0
        %v2377 = vadd.f32 0.0, %v2376
        %2378 = vmatmul.f32.gmra.mxu0 %v2357
        %v2379 = vpop.f32.mrf.mxu0
        %v2380 = vadd.f32 0.0, %v2379
        %2381 = vdwg.mxu0
        %v2383 = vsel %vm1899, %v2253, 0
        %v2386 = vsel %vm1899, %v2255, 0
        %2388 = vmatpush.msra.mxu0 0.0
        %2389 = vmatpush.msra.mxu0 0.0
        %2390 = vmatpush.msra.mxu0 0.0
        %2391 = vmatpush.msra.mxu0 0.0
        %2392 = vmatpush.msra.mxu0 0.0
        %2393 = vmatpush.msra.mxu0 0.0
        %2394 = vmatpush.msra.mxu0 0.0
        %2395 = vmatpush.msra.mxu0 0.0
        %2396 = vmatpush.msra.mxu0 0.0
        %2397 = vmatpush.msra.mxu0 0.0
        %2398 = vmatpush.msra.mxu0 0.0
        %2399 = vmatpush.msra.mxu0 0.0
        %2400 = vmatpush.msra.mxu0 0.0
        %2401 = vmatpush.msra.mxu0 0.0
        %2402 = vmatpush.msra.mxu0 %v1888
        %2403 = vmatpush.msra.mxu0 %v1776
        %2404 = vmatmul.f32.gmra.mxu0 %v2383
        %v2405 = vpop.f32.mrf.mxu0
        %v2406 = vadd.f32 0.0, %v2405
        %2407 = vmatmul.f32.gmra.mxu0 %v2386
        %v2408 = vpop.f32.mrf.mxu0
        %v2409 = vadd.f32 0.0, %v2408
        %2410 = vdwg.mxu0
        %v2412 = vsel %vm1899, %v2257, 0
        %v2415 = vsel %vm1899, %v2259, 0
        %2417 = vmatpush.msra.mxu0 0.0
        %2418 = vmatpush.msra.mxu0 0.0
        %2419 = vmatpush.msra.mxu0 0.0
        %2420 = vmatpush.msra.mxu0 0.0
        %2421 = vmatpush.msra.mxu0 0.0
        %2422 = vmatpush.msra.mxu0 0.0
        %2423 = vmatpush.msra.mxu0 0.0
        %2424 = vmatpush.msra.mxu0 0.0
        %2425 = vmatpush.msra.mxu0 0.0
        %2426 = vmatpush.msra.mxu0 0.0
        %2427 = vmatpush.msra.mxu0 0.0
        %2428 = vmatpush.msra.mxu0 0.0
        %2429 = vmatpush.msra.mxu0 0.0
        %2430 = vmatpush.msra.mxu0 0.0
        %2431 = vmatpush.msra.mxu0 %v1890
        %2432 = vmatpush.msra.mxu0 %v1778
        %2433 = vmatmul.f32.gmra.mxu0 %v2412
        %v2434 = vpop.f32.mrf.mxu0
        %v2435 = vadd.f32 0.0, %v2434
        %2436 = vmatmul.f32.gmra.mxu0 %v2415
        %v2437 = vpop.f32.mrf.mxu0
        %v2438 = vadd.f32 0.0, %v2437
        %2439 = vdwg.mxu0
        %v2441 = vsel %vm1899, %v2261, 0
        %v2444 = vsel %vm1899, %v2263, 0
        %2446 = vmatpush.msra.mxu0 0.0
        %2447 = vmatpush.msra.mxu0 0.0
        %2448 = vmatpush.msra.mxu0 0.0
        %2449 = vmatpush.msra.mxu0 0.0
        %2450 = vmatpush.msra.mxu0 0.0
        %2451 = vmatpush.msra.mxu0 0.0
        %2452 = vmatpush.msra.mxu0 0.0
        %2453 = vmatpush.msra.mxu0 0.0
        %2454 = vmatpush.msra.mxu0 0.0
        %2455 = vmatpush.msra.mxu0 0.0
        %2456 = vmatpush.msra.mxu0 0.0
        %2457 = vmatpush.msra.mxu0 0.0
        %2458 = vmatpush.msra.mxu0 0.0
        %2459 = vmatpush.msra.mxu0 0.0
        %2460 = vmatpush.msra.mxu0 %v1892
        %2461 = vmatpush.msra.mxu0 %v1780
        %2462 = vmatmul.f32.gmra.mxu0 %v2441
        %v2463 = vpop.f32.mrf.mxu0
        %v2464 = vadd.f32 0.0, %v2463
        %2465 = vmatmul.f32.gmra.mxu0 %v2444
        %v2466 = vpop.f32.mrf.mxu0
        %v2467 = vadd.f32 0.0, %v2466
        %2468 = vdwg.mxu0
        %v2470 = vsel %vm1899, %v2265, 0
        %v2473 = vsel %vm1899, %v2267, 0
        %2475 = vmatpush.msra.mxu0 0.0
        %2476 = vmatpush.msra.mxu0 0.0
        %2477 = vmatpush.msra.mxu0 0.0
        %2478 = vmatpush.msra.mxu0 0.0
        %2479 = vmatpush.msra.mxu0 0.0
        %2480 = vmatpush.msra.mxu0 0.0
        %2481 = vmatpush.msra.mxu0 0.0
        %2482 = vmatpush.msra.mxu0 0.0
        %2483 = vmatpush.msra.mxu0 0.0
        %2484 = vmatpush.msra.mxu0 0.0
        %2485 = vmatpush.msra.mxu0 0.0
        %2486 = vmatpush.msra.mxu0 0.0
        %2487 = vmatpush.msra.mxu0 0.0
        %2488 = vmatpush.msra.mxu0 0.0
        %2489 = vmatpush.msra.mxu0 %v1894
        %2490 = vmatpush.msra.mxu0 %v1782
        %2491 = vmatmul.f32.gmra.mxu0 %v2470
        %v2492 = vpop.f32.mrf.mxu0
        %v2493 = vadd.f32 0.0, %v2492
        %2494 = vmatmul.f32.gmra.mxu0 %v2473
        %v2495 = vpop.f32.mrf.mxu0
        %v2496 = vadd.f32 0.0, %v2495
        %2497 = vdwg.mxu0
        %v2499 = vsel %vm1899, %v2269, 0
        %v2502 = vsel %vm1899, %v2271, 0
        %2504 = vmatpush.msra.mxu0 0.0
        %2505 = vmatpush.msra.mxu0 0.0
        %2506 = vmatpush.msra.mxu0 0.0
        %2507 = vmatpush.msra.mxu0 0.0
        %2508 = vmatpush.msra.mxu0 0.0
        %2509 = vmatpush.msra.mxu0 0.0
        %2510 = vmatpush.msra.mxu0 0.0
        %2511 = vmatpush.msra.mxu0 0.0
        %2512 = vmatpush.msra.mxu0 0.0
        %2513 = vmatpush.msra.mxu0 0.0
        %2514 = vmatpush.msra.mxu0 0.0
        %2515 = vmatpush.msra.mxu0 0.0
        %2516 = vmatpush.msra.mxu0 0.0
        %2517 = vmatpush.msra.mxu0 0.0
        %2518 = vmatpush.msra.mxu0 %v1896
        %2519 = vmatpush.msra.mxu0 %v1784
        %2520 = vmatmul.f32.gmra.mxu0 %v2499
        %v2521 = vpop.f32.mrf.mxu0
        %v2522 = vadd.f32 0.0, %v2521
        %2523 = vmatmul.f32.gmra.mxu0 %v2502
        %v2524 = vpop.f32.mrf.mxu0
        %v2525 = vadd.f32 0.0, %v2524
        %2526 = vdwg.mxu0
        %v2528 = vsel %vm1899, %v2273, 0
        %v2531 = vsel %vm1899, %v2275, 0
        %2533 = vmatpush.msra.mxu0 0.0
        %2534 = vmatpush.msra.mxu0 0.0
        %2535 = vmatpush.msra.mxu0 0.0
        %2536 = vmatpush.msra.mxu0 0.0
        %2537 = vmatpush.msra.mxu0 0.0
        %2538 = vmatpush.msra.mxu0 0.0
        %2539 = vmatpush.msra.mxu0 0.0
        %2540 = vmatpush.msra.mxu0 0.0
        %2541 = vmatpush.msra.mxu0 0.0
        %2542 = vmatpush.msra.mxu0 0.0
        %2543 = vmatpush.msra.mxu0 0.0
        %2544 = vmatpush.msra.mxu0 0.0
        %2545 = vmatpush.msra.mxu0 0.0
        %2546 = vmatpush.msra.mxu0 0.0
        %2547 = vmatpush.msra.mxu0 %v1898
        %2548 = vmatpush.msra.mxu0 %v1786
        %2549 = vmatmul.f32.gmra.mxu0 %v2528
        %v2550 = vpop.f32.mrf.mxu0
        %v2551 = vadd.f32 0.0, %v2550
        %2552 = vmatmul.f32.gmra.mxu0 %v2531
        %v2553 = vpop.f32.mrf.mxu0
        %v2554 = vadd.f32 0.0, %v2553
        %2555 = vdwg.mxu0
        %v2556 = vrcp.pop %v2278
        %v2557 = vrcp.pop %v2281
        %v2558 = vrcp.pop %v2284
        %v2559 = vrcp.pop %v2287
        %v2560 = vrcp.pop %v2290
        %v2561 = vrcp.pop %v2293
        %v2562 = vrcp.pop %v2296
        %v2563 = vrcp.pop %v2299
        %v2564 = vrcp.pop %v2302
        %v2565 = vrcp.pop %v2305
        %v2566 = vrcp.pop %v2308
        %v2567 = vrcp.pop %v2311
        %v2568 = vrcp.pop %v2314
        %v2569 = vrcp.pop %v2317
        %v2570 = vrcp.pop %v2320
        %v2571 = vrcp.pop %v2323
        %v2572 = vmul.f32 %v2348, %v2556
        %v2573 = vmul.f32 %v2351, %v2557
        %v2574 = vmul.f32 %v2377, %v2558
        %v2575 = vmul.f32 %v2380, %v2559
        %v2576 = vmul.f32 %v2406, %v2560
        %v2577 = vmul.f32 %v2409, %v2561
        %v2578 = vmul.f32 %v2435, %v2562
        %v2579 = vmul.f32 %v2438, %v2563
        %v2580 = vmul.f32 %v2464, %v2564
        %v2581 = vmul.f32 %v2467, %v2565
        %v2582 = vmul.f32 %v2493, %v2566
        %v2583 = vmul.f32 %v2496, %v2567
        %v2584 = vmul.f32 %v2522, %v2568
        %v2585 = vmul.f32 %v2525, %v2569
        %v2586 = vmul.f32 %v2551, %v2570
        %v2587 = vmul.f32 %v2554, %v2571
        %v2588 = vrot.slane %v2576, 4
        %v2589 = vsel %vm467, %v2588, %v2572
        %v2590 = vrot.slane %v2572, 4
        %v2591 = vsel %vm467, %v2576, %v2590
        %v2593 = vunpack.c.l.s4 1983009808
        %v2594 = vunpack.c.0.s8 %v2593
        %v2595 = vperm.slane %v2589, %v2594
        %v2597 = vunpack.c.l.s4 1983009808
        %v2598 = vunpack.c.0.s8 %v2597
        %v2599 = vperm.slane %v2591, %v2598
        %v2600 = vrot.slane %v2578, 4
        %v2601 = vsel %vm467, %v2600, %v2574
        %v2602 = vrot.slane %v2574, 4
        %v2603 = vsel %vm467, %v2578, %v2602
        %v2605 = vunpack.c.l.s4 1983009808
        %v2606 = vunpack.c.0.s8 %v2605
        %v2607 = vperm.slane %v2601, %v2606
        %v2609 = vunpack.c.l.s4 1983009808
        %v2610 = vunpack.c.0.s8 %v2609
        %v2611 = vperm.slane %v2603, %v2610
        %v2612 = vrot.slane %v2584, 4
        %v2613 = vsel %vm467, %v2612, %v2580
        %v2614 = vrot.slane %v2580, 4
        %v2615 = vsel %vm467, %v2584, %v2614
        %v2617 = vunpack.c.l.s4 1983009808
        %v2618 = vunpack.c.0.s8 %v2617
        %v2619 = vperm.slane %v2613, %v2618
        %v2621 = vunpack.c.l.s4 1983009808
        %v2622 = vunpack.c.0.s8 %v2621
        %v2623 = vperm.slane %v2615, %v2622
        %v2624 = vrot.slane %v2586, 4
        %v2625 = vsel %vm467, %v2624, %v2582
        %v2626 = vrot.slane %v2582, 4
        %v2627 = vsel %vm467, %v2586, %v2626
        %v2629 = vunpack.c.l.s4 1983009808
        %v2630 = vunpack.c.0.s8 %v2629
        %v2631 = vperm.slane %v2625, %v2630
        %v2633 = vunpack.c.l.s4 1983009808
        %v2634 = vunpack.c.0.s8 %v2633
        %v2635 = vperm.slane %v2627, %v2634
        %v2636 = vrot.slane %v2607, 4
        %v2637 = vsel %vm467, %v2636, %v2595
        %v2638 = vrot.slane %v2595, 4
        %v2639 = vsel %vm467, %v2607, %v2638
        %v2641 = vunpack.c.l.s4 1934713408
        %v2642 = vunpack.c.0.s8 %v2641
        %v2643 = vperm.slane %v2637, %v2642
        %v2645 = vunpack.c.l.s4 1934713408
        %v2646 = vunpack.c.0.s8 %v2645
        %v2647 = vperm.slane %v2639, %v2646
        %v2648 = vrot.slane %v2611, 4
        %v2649 = vsel %vm467, %v2648, %v2599
        %v2650 = vrot.slane %v2599, 4
        %v2651 = vsel %vm467, %v2611, %v2650
        %v2653 = vunpack.c.l.s4 1934713408
        %v2654 = vunpack.c.0.s8 %v2653
        %v2655 = vperm.slane %v2649, %v2654
        %v2657 = vunpack.c.l.s4 1934713408
        %v2658 = vunpack.c.0.s8 %v2657
        %v2659 = vperm.slane %v2651, %v2658
        %v2660 = vrot.slane %v2631, 4
        %v2661 = vsel %vm467, %v2660, %v2619
        %v2662 = vrot.slane %v2619, 4
        %v2663 = vsel %vm467, %v2631, %v2662
        %v2665 = vunpack.c.l.s4 1934713408
        %v2666 = vunpack.c.0.s8 %v2665
        %v2667 = vperm.slane %v2661, %v2666
        %v2669 = vunpack.c.l.s4 1934713408
        %v2670 = vunpack.c.0.s8 %v2669
        %v2671 = vperm.slane %v2663, %v2670
        %v2672 = vrot.slane %v2635, 4
        %v2673 = vsel %vm467, %v2672, %v2623
        %v2674 = vrot.slane %v2623, 4
        %v2675 = vsel %vm467, %v2635, %v2674
        %v2677 = vunpack.c.l.s4 1934713408
        %v2678 = vunpack.c.0.s8 %v2677
        %v2679 = vperm.slane %v2673, %v2678
        %v2681 = vunpack.c.l.s4 1934713408
        %v2682 = vunpack.c.0.s8 %v2681
        %v2683 = vperm.slane %v2675, %v2682
        %v2684 = vrot.slane %v2667, 4
        %v2685 = vsel %vm467, %v2684, %v2643
        %v2686 = vrot.slane %v2643, 4
        %v2687 = vsel %vm467, %v2667, %v2686
        %v2688 = vrot.slane %v2671, 4
        %v2689 = vsel %vm467, %v2688, %v2647
        %v2690 = vrot.slane %v2647, 4
        %v2691 = vsel %vm467, %v2671, %v2690
        %v2692 = vrot.slane %v2679, 4
        %v2693 = vsel %vm467, %v2692, %v2655
        %v2694 = vrot.slane %v2655, 4
        %v2695 = vsel %vm467, %v2679, %v2694
        %v2696 = vrot.slane %v2683, 4
        %v2697 = vsel %vm467, %v2696, %v2659
        %v2698 = vrot.slane %v2659, 4
        %v2699 = vsel %vm467, %v2683, %v2698
        %v2700 = vrot.slane %v2577, 4
        %v2701 = vsel %vm467, %v2700, %v2573
        %v2702 = vrot.slane %v2573, 4
        %v2703 = vsel %vm467, %v2577, %v2702
        %v2705 = vunpack.c.l.s4 1983009808
        %v2706 = vunpack.c.0.s8 %v2705
        %v2707 = vperm.slane %v2701, %v2706
        %v2709 = vunpack.c.l.s4 1983009808
        %v2710 = vunpack.c.0.s8 %v2709
        %v2711 = vperm.slane %v2703, %v2710
        %v2712 = vrot.slane %v2579, 4
        %v2713 = vsel %vm467, %v2712, %v2575
        %v2714 = vrot.slane %v2575, 4
        %v2715 = vsel %vm467, %v2579, %v2714
        %v2717 = vunpack.c.l.s4 1983009808
        %v2718 = vunpack.c.0.s8 %v2717
        %v2719 = vperm.slane %v2713, %v2718
        %v2721 = vunpack.c.l.s4 1983009808
        %v2722 = vunpack.c.0.s8 %v2721
        %v2723 = vperm.slane %v2715, %v2722
        %v2724 = vrot.slane %v2585, 4
        %v2725 = vsel %vm467, %v2724, %v2581
        %v2726 = vrot.slane %v2581, 4
        %v2727 = vsel %vm467, %v2585, %v2726
        %v2729 = vunpack.c.l.s4 1983009808
        %v2730 = vunpack.c.0.s8 %v2729
        %v2731 = vperm.slane %v2725, %v2730
        %v2733 = vunpack.c.l.s4 1983009808
        %v2734 = vunpack.c.0.s8 %v2733
        %v2735 = vperm.slane %v2727, %v2734
        %v2736 = vrot.slane %v2587, 4
        %v2737 = vsel %vm467, %v2736, %v2583
        %v2738 = vrot.slane %v2583, 4
        %v2739 = vsel %vm467, %v2587, %v2738
        %v2741 = vunpack.c.l.s4 1983009808
        %v2742 = vunpack.c.0.s8 %v2741
        %v2743 = vperm.slane %v2737, %v2742
        %v2745 = vunpack.c.l.s4 1983009808
        %v2746 = vunpack.c.0.s8 %v2745
        %v2747 = vperm.slane %v2739, %v2746
        %v2748 = vrot.slane %v2719, 4
        %v2749 = vsel %vm467, %v2748, %v2707
        %v2750 = vrot.slane %v2707, 4
        %v2751 = vsel %vm467, %v2719, %v2750
        %v2753 = vunpack.c.l.s4 1934713408
        %v2754 = vunpack.c.0.s8 %v2753
        %v2755 = vperm.slane %v2749, %v2754
        %v2757 = vunpack.c.l.s4 1934713408
        %v2758 = vunpack.c.0.s8 %v2757
        %v2759 = vperm.slane %v2751, %v2758
        %v2760 = vrot.slane %v2723, 4
        %v2761 = vsel %vm467, %v2760, %v2711
        %v2762 = vrot.slane %v2711, 4
        %v2763 = vsel %vm467, %v2723, %v2762
        %v2765 = vunpack.c.l.s4 1934713408
        %v2766 = vunpack.c.0.s8 %v2765
        %v2767 = vperm.slane %v2761, %v2766
        %v2769 = vunpack.c.l.s4 1934713408
        %v2770 = vunpack.c.0.s8 %v2769
        %v2771 = vperm.slane %v2763, %v2770
        %v2772 = vrot.slane %v2743, 4
        %v2773 = vsel %vm467, %v2772, %v2731
        %v2774 = vrot.slane %v2731, 4
        %v2775 = vsel %vm467, %v2743, %v2774
        %v2777 = vunpack.c.l.s4 1934713408
        %v2778 = vunpack.c.0.s8 %v2777
        %v2779 = vperm.slane %v2773, %v2778
        %v2781 = vunpack.c.l.s4 1934713408
        %v2782 = vunpack.c.0.s8 %v2781
        %v2783 = vperm.slane %v2775, %v2782
        %v2784 = vrot.slane %v2747, 4
        %v2785 = vsel %vm467, %v2784, %v2735
        %v2786 = vrot.slane %v2735, 4
        %v2787 = vsel %vm467, %v2747, %v2786
        %v2789 = vunpack.c.l.s4 1934713408
        %v2790 = vunpack.c.0.s8 %v2789
        %v2791 = vperm.slane %v2785, %v2790
        %v2793 = vunpack.c.l.s4 1934713408
        %v2794 = vunpack.c.0.s8 %v2793
        %v2795 = vperm.slane %v2787, %v2794
        %v2796 = vrot.slane %v2779, 4
        %v2797 = vsel %vm467, %v2796, %v2755
        %v2798 = vrot.slane %v2755, 4
        %v2799 = vsel %vm467, %v2779, %v2798
        %v2800 = vrot.slane %v2783, 4
        %v2801 = vsel %vm467, %v2800, %v2759
        %v2802 = vrot.slane %v2759, 4
        %v2803 = vsel %vm467, %v2783, %v2802
        %v2804 = vrot.slane %v2791, 4
        %v2805 = vsel %vm467, %v2804, %v2767
        %v2806 = vrot.slane %v2767, 4
        %v2807 = vsel %vm467, %v2791, %v2806
        %v2808 = vrot.slane %v2795, 4
        %v2809 = vsel %vm467, %v2808, %v2771
        %v2810 = vrot.slane %v2771, 4
        %v2811 = vsel %vm467, %v2795, %v2810
        %v2812 = vrot.slane %v2689, 4
        %v2813 = vsel %vm467, %v2812, %v2685
        %v2814 = vrot.slane %v2685, 4
        %v2815 = vsel %vm467, %v2689, %v2814
        %v2817 = vunpack.c.l.s4 1983009808
        %v2818 = vunpack.c.0.s8 %v2817
        %v2819 = vperm.slane %v2813, %v2818
        %v2821 = vunpack.c.l.s4 1983009808
        %v2822 = vunpack.c.0.s8 %v2821
        %v2823 = vperm.slane %v2815, %v2822
        %v2824 = vrot.slane %v2691, 4
        %v2825 = vsel %vm467, %v2824, %v2687
        %v2826 = vrot.slane %v2687, 4
        %v2827 = vsel %vm467, %v2691, %v2826
        %v2829 = vunpack.c.l.s4 1983009808
        %v2830 = vunpack.c.0.s8 %v2829
        %v2831 = vperm.slane %v2825, %v2830
        %v2833 = vunpack.c.l.s4 1983009808
        %v2834 = vunpack.c.0.s8 %v2833
        %v2835 = vperm.slane %v2827, %v2834
        %v2836 = vrot.slane %v2697, 4
        %v2837 = vsel %vm467, %v2836, %v2693
        %v2838 = vrot.slane %v2693, 4
        %v2839 = vsel %vm467, %v2697, %v2838
        %v2841 = vunpack.c.l.s4 1983009808
        %v2842 = vunpack.c.0.s8 %v2841
        %v2843 = vperm.slane %v2837, %v2842
        %v2845 = vunpack.c.l.s4 1983009808
        %v2846 = vunpack.c.0.s8 %v2845
        %v2847 = vperm.slane %v2839, %v2846
        %v2848 = vrot.slane %v2699, 4
        %v2849 = vsel %vm467, %v2848, %v2695
        %v2850 = vrot.slane %v2695, 4
        %v2851 = vsel %vm467, %v2699, %v2850
        %v2853 = vunpack.c.l.s4 1983009808
        %v2854 = vunpack.c.0.s8 %v2853
        %v2855 = vperm.slane %v2849, %v2854
        %v2857 = vunpack.c.l.s4 1983009808
        %v2858 = vunpack.c.0.s8 %v2857
        %v2859 = vperm.slane %v2851, %v2858
        %v2860 = vrot.slane %v2831, 4
        %v2861 = vsel %vm467, %v2860, %v2819
        %v2862 = vrot.slane %v2819, 4
        %v2863 = vsel %vm467, %v2831, %v2862
        %v2865 = vunpack.c.l.s4 1934713408
        %v2866 = vunpack.c.0.s8 %v2865
        %v2867 = vperm.slane %v2861, %v2866
        %v2869 = vunpack.c.l.s4 1934713408
        %v2870 = vunpack.c.0.s8 %v2869
        %v2871 = vperm.slane %v2863, %v2870
        %v2872 = vrot.slane %v2835, 4
        %v2873 = vsel %vm467, %v2872, %v2823
        %v2874 = vrot.slane %v2823, 4
        %v2875 = vsel %vm467, %v2835, %v2874
        %v2877 = vunpack.c.l.s4 1934713408
        %v2878 = vunpack.c.0.s8 %v2877
        %v2879 = vperm.slane %v2873, %v2878
        %v2881 = vunpack.c.l.s4 1934713408
        %v2882 = vunpack.c.0.s8 %v2881
        %v2883 = vperm.slane %v2875, %v2882
        %v2884 = vrot.slane %v2855, 4
        %v2885 = vsel %vm467, %v2884, %v2843
        %v2886 = vrot.slane %v2843, 4
        %v2887 = vsel %vm467, %v2855, %v2886
        %v2889 = vunpack.c.l.s4 1934713408
        %v2890 = vunpack.c.0.s8 %v2889
        %v2891 = vperm.slane %v2885, %v2890
        %v2893 = vunpack.c.l.s4 1934713408
        %v2894 = vunpack.c.0.s8 %v2893
        %v2895 = vperm.slane %v2887, %v2894
        %v2896 = vrot.slane %v2859, 4
        %v2897 = vsel %vm467, %v2896, %v2847
        %v2898 = vrot.slane %v2847, 4
        %v2899 = vsel %vm467, %v2859, %v2898
        %v2901 = vunpack.c.l.s4 1934713408
        %v2902 = vunpack.c.0.s8 %v2901
        %v2903 = vperm.slane %v2897, %v2902
        %v2905 = vunpack.c.l.s4 1934713408
        %v2906 = vunpack.c.0.s8 %v2905
        %v2907 = vperm.slane %v2899, %v2906
        %v2908 = vrot.slane %v2891, 4
        %v2909 = vsel %vm467, %v2908, %v2867
        %v2910 = vrot.slane %v2867, 4
        %v2911 = vsel %vm467, %v2891, %v2910
        %v2912 = vrot.slane %v2895, 4
        %v2913 = vsel %vm467, %v2912, %v2871
        %v2914 = vrot.slane %v2871, 4
        %v2915 = vsel %vm467, %v2895, %v2914
        %v2916 = vrot.slane %v2903, 4
        %v2917 = vsel %vm467, %v2916, %v2879
        %v2918 = vrot.slane %v2879, 4
        %v2919 = vsel %vm467, %v2903, %v2918
        %v2920 = vrot.slane %v2907, 4
        %v2921 = vsel %vm467, %v2920, %v2883
        %v2922 = vrot.slane %v2883, 4
        %v2923 = vsel %vm467, %v2907, %v2922
        %v2924 = vrot.slane %v2801, 4
        %v2925 = vsel %vm467, %v2924, %v2797
        %v2926 = vrot.slane %v2797, 4
        %v2927 = vsel %vm467, %v2801, %v2926
        %v2929 = vunpack.c.l.s4 1983009808
        %v2930 = vunpack.c.0.s8 %v2929
        %v2931 = vperm.slane %v2925, %v2930
        %v2933 = vunpack.c.l.s4 1983009808
        %v2934 = vunpack.c.0.s8 %v2933
        %v2935 = vperm.slane %v2927, %v2934
        %v2936 = vrot.slane %v2803, 4
        %v2937 = vsel %vm467, %v2936, %v2799
        %v2938 = vrot.slane %v2799, 4
        %v2939 = vsel %vm467, %v2803, %v2938
        %v2941 = vunpack.c.l.s4 1983009808
        %v2942 = vunpack.c.0.s8 %v2941
        %v2943 = vperm.slane %v2937, %v2942
        %v2945 = vunpack.c.l.s4 1983009808
        %v2946 = vunpack.c.0.s8 %v2945
        %v2947 = vperm.slane %v2939, %v2946
        %v2948 = vrot.slane %v2809, 4
        %v2949 = vsel %vm467, %v2948, %v2805
        %v2950 = vrot.slane %v2805, 4
        %v2951 = vsel %vm467, %v2809, %v2950
        %v2953 = vunpack.c.l.s4 1983009808
        %v2954 = vunpack.c.0.s8 %v2953
        %v2955 = vperm.slane %v2949, %v2954
        %v2957 = vunpack.c.l.s4 1983009808
        %v2958 = vunpack.c.0.s8 %v2957
        %v2959 = vperm.slane %v2951, %v2958
        %v2960 = vrot.slane %v2811, 4
        %v2961 = vsel %vm467, %v2960, %v2807
        %v2962 = vrot.slane %v2807, 4
        %v2963 = vsel %vm467, %v2811, %v2962
        %v2965 = vunpack.c.l.s4 1983009808
        %v2966 = vunpack.c.0.s8 %v2965
        %v2967 = vperm.slane %v2961, %v2966
        %v2969 = vunpack.c.l.s4 1983009808
        %v2970 = vunpack.c.0.s8 %v2969
        %v2971 = vperm.slane %v2963, %v2970
        %v2972 = vrot.slane %v2943, 4
        %v2973 = vsel %vm467, %v2972, %v2931
        %v2974 = vrot.slane %v2931, 4
        %v2975 = vsel %vm467, %v2943, %v2974
        %v2977 = vunpack.c.l.s4 1934713408
        %v2978 = vunpack.c.0.s8 %v2977
        %v2979 = vperm.slane %v2973, %v2978
        %v2981 = vunpack.c.l.s4 1934713408
        %v2982 = vunpack.c.0.s8 %v2981
        %v2983 = vperm.slane %v2975, %v2982
        %v2984 = vrot.slane %v2947, 4
        %v2985 = vsel %vm467, %v2984, %v2935
        %v2986 = vrot.slane %v2935, 4
        %v2987 = vsel %vm467, %v2947, %v2986
        %v2989 = vunpack.c.l.s4 1934713408
        %v2990 = vunpack.c.0.s8 %v2989
        %v2991 = vperm.slane %v2985, %v2990
        %v2993 = vunpack.c.l.s4 1934713408
        %v2994 = vunpack.c.0.s8 %v2993
        %v2995 = vperm.slane %v2987, %v2994
        %v2996 = vrot.slane %v2967, 4
        %v2997 = vsel %vm467, %v2996, %v2955
        %v2998 = vrot.slane %v2955, 4
        %v2999 = vsel %vm467, %v2967, %v2998
        %v3001 = vunpack.c.l.s4 1934713408
        %v3002 = vunpack.c.0.s8 %v3001
        %v3003 = vperm.slane %v2997, %v3002
        %v3005 = vunpack.c.l.s4 1934713408
        %v3006 = vunpack.c.0.s8 %v3005
        %v3007 = vperm.slane %v2999, %v3006
        %v3008 = vrot.slane %v2971, 4
        %v3009 = vsel %vm467, %v3008, %v2959
        %v3010 = vrot.slane %v2959, 4
        %v3011 = vsel %vm467, %v2971, %v3010
        %v3013 = vunpack.c.l.s4 1934713408
        %v3014 = vunpack.c.0.s8 %v3013
        %v3015 = vperm.slane %v3009, %v3014
        %v3017 = vunpack.c.l.s4 1934713408
        %v3018 = vunpack.c.0.s8 %v3017
        %v3019 = vperm.slane %v3011, %v3018
        %v3020 = vrot.slane %v3003, 4
        %v3021 = vsel %vm467, %v3020, %v2979
        %v3022 = vrot.slane %v2979, 4
        %v3023 = vsel %vm467, %v3003, %v3022
        %v3024 = vrot.slane %v3007, 4
        %v3025 = vsel %vm467, %v3024, %v2983
        %v3026 = vrot.slane %v2983, 4
        %v3027 = vsel %vm467, %v3007, %v3026
        %v3028 = vrot.slane %v3015, 4
        %v3029 = vsel %vm467, %v3028, %v2991
        %v3030 = vrot.slane %v2991, 4
        %v3031 = vsel %vm467, %v3015, %v3030
        %v3032 = vrot.slane %v3019, 4
        %v3033 = vsel %vm467, %v3032, %v2995
        %v3034 = vrot.slane %v2995, 4
        %v3035 = vsel %vm467, %v3019, %v3034
        %3038 = vrot.lane.b32.xlu0 %v2911, 16
        %v3039 = vpop.permute.xlu0 %3038
        %3040 = vrot.lane.b32.xlu0 %v3023, 16
        %v3041 = vpop.permute.xlu0 %3040
        %3046 = vrot.lane.b32.xlu0 %v2913, 32
        %v3047 = vpop.permute.xlu0 %3046
        %3048 = vrot.lane.b32.xlu0 %v3025, 32
        %v3049 = vpop.permute.xlu0 %3048
        %3054 = vrot.lane.b32.xlu0 %v2915, 48
        %v3055 = vpop.permute.xlu0 %3054
        %3056 = vrot.lane.b32.xlu0 %v3027, 48
        %v3057 = vpop.permute.xlu0 %3056
        %3062 = vrot.lane.b32.xlu0 %v2917, 64
        %v3063 = vpop.permute.xlu0 %3062
        %3064 = vrot.lane.b32.xlu0 %v3029, 64
        %v3065 = vpop.permute.xlu0 %3064
        %3070 = vrot.lane.b32.xlu0 %v2919, 80
        %v3071 = vpop.permute.xlu0 %3070
        %3072 = vrot.lane.b32.xlu0 %v3031, 80
        %v3073 = vpop.permute.xlu0 %3072
        %3078 = vrot.lane.b32.xlu0 %v2921, 96
        %v3079 = vpop.permute.xlu0 %3078
        %3080 = vrot.lane.b32.xlu0 %v3033, 96
        %v3081 = vpop.permute.xlu0 %3080
        %3086 = vrot.lane.b32.xlu0 %v2923, 112
        %v3087 = vpop.permute.xlu0 %3086
        %3088 = vrot.lane.b32.xlu0 %v3035, 112
        %v3089 = vpop.permute.xlu0 %3088
        %v3092 = vsel %vm1899, %v2909, %v3039
        %v3093 = vsel %vm1899, %v3021, %v3041
        %vm3094 = vcmask 261120
        %v3095 = vsel %vm3094, %v3092, %v3047
        %v3096 = vsel %vm3094, %v3093, %v3049
        %vm3097 = vcmask 392192
        %v3098 = vsel %vm3097, %v3095, %v3055
        %v3099 = vsel %vm3097, %v3096, %v3057
        %vm3100 = vcmask 523264
        %v3101 = vsel %vm3100, %v3098, %v3063
        %v3102 = vsel %vm3100, %v3099, %v3065
        %vm3103 = vcmask 654336
        %v3104 = vsel %vm3103, %v3101, %v3071
        %v3105 = vsel %vm3103, %v3102, %v3073
        %vm3106 = vcmask 785408
        %v3107 = vsel %vm3106, %v3104, %v3079
        %v3108 = vsel %vm3106, %v3105, %v3081
        %vm3109 = vcmask 916480
        %v3110 = vsel %vm3109, %v3107, %v3087
        %v3111 = vsel %vm3109, %v3108, %v3089
        %v3112 = vld [vmem:[#allocation8] sm:$0xff]
        %v3113 = vld [vmem:[#allocation8 + $0x8] sm:$0xff]
        %v3114 = vld [vmem:[#allocation8 + $0x10] sm:$0xff]
        %v3115 = vld [vmem:[#allocation8 + $0x18] sm:$0xff]
        %v3116 = vld [vmem:[#allocation8 + $0x20] sm:$0xff]
        %v3117 = vld [vmem:[#allocation8 + $0x28] sm:$0xff]
        %v3118 = vld [vmem:[#allocation8 + $0x30] sm:$0xff]
        %v3119 = vld [vmem:[#allocation8 + $0x38] sm:$0xff]
        %v3120 = vld [vmem:[#allocation8 + $0x40] sm:$0xff]
        %v3121 = vld [vmem:[#allocation8 + $0x48] sm:$0xff]
        %v3122 = vld [vmem:[#allocation8 + $0x50] sm:$0xff]
        %v3123 = vld [vmem:[#allocation8 + $0x58] sm:$0xff]
        %v3124 = vld [vmem:[#allocation8 + $0x60] sm:$0xff]
        %v3125 = vld [vmem:[#allocation8 + $0x68] sm:$0xff]
        %v3126 = vld [vmem:[#allocation8 + $0x70] sm:$0xff]
        %v3127 = vld [vmem:[#allocation8 + $0x78] sm:$0xff]
        %v3128 = vld [vmem:[%s4] sm:$0x1]
        %v3130 = vperm.slane %v3128, 0
        %3132 = vmatpush.msra.mxu0 %v3127
        %3133 = vmatpush.msra.mxu0 %v3126
        %3134 = vmatpush.msra.mxu0 %v3125
        %3135 = vmatpush.msra.mxu0 %v3124
        %3136 = vmatpush.msra.mxu0 %v3123
        %3137 = vmatpush.msra.mxu0 %v3122
        %3138 = vmatpush.msra.mxu0 %v3121
        %3139 = vmatpush.msra.mxu0 %v3120
        %3140 = vmatpush.msra.mxu0 %v3119
        %3141 = vmatpush.msra.mxu0 %v3118
        %3142 = vmatpush.msra.mxu0 %v3117
        %3143 = vmatpush.msra.mxu0 %v3116
        %3144 = vmatpush.msra.mxu0 %v3115
        %3145 = vmatpush.msra.mxu0 %v3114
        %3146 = vmatpush.msra.mxu0 %v3113
        %3147 = vmatpush.msra.mxu0 %v3112
        %3148 = vmatmul.f32.gmra.mxu0 %v3110
        %v3149 = vpop.f32.mrf.mxu0
        %v3150 = vadd.f32 %v3130, %v3149
        %3151 = vmatmul.f32.gmra.mxu0 %v3111
        %v3152 = vpop.f32.mrf.mxu0
        %v3153 = vadd.f32 %v3130, %v3152
        %3154 = vdwg.mxu0
        %3155 = vst [vmem:[%s292] sm:$0xff] %v3150
        %3156 = vst [vmem:[%s292 + $0x8] sm:$0xff] %v3153
        %s3157 = sand.u32 %s142, 1
        %s3158 = scalar_lea.sflag [#allocation4], %s3157
        %s3159 = sand.u32 %s142, 1
        %s3160 = smul.addr %s3159, 16
        %s3161 = scalar_lea.vmem [#allocation10], %s3160
        // Predicated region
        $region57: #{tpu_custom_call.1} parent=39 // pred_check
          %p3162 = pneg %p152
        $region58: #{tpu_custom_call.1} parent=39 // pred_check_branch
          %3164 = sbr.rel (%p3162) target = $region60
        $region59: #{tpu_custom_call.1} parent=39 // pred_region
          %3166 = vsyncadd %s3158, 0
          %s3167 = smul.addr %s24, 2
          %s3168 = smul.addr %s3167, 8
          %s3169 = scalar_lea.hbm %s5, %s3168
          %s3170 = sshll.u32 %s3161, 4
          %s3171 = int_to_ptr.vmem [resolvable:$true] %s3170
          %s3172 = sshll.u32 %s3169, 4
          %s3173 = int_to_ptr.hbm [resolvable:$true] %s3172
          %3178 = dma.vmem_to_hbm [thread:$0]  %s3171, 256, %s3173, %s3158, 128, 128, 8
        $region60: #{tpu_custom_call.1} parent=39 // pred_fallthru
          _
      $region40: #{tpu_custom_call.1} parent=5 // pred_fallthru
        _
      %p3179 = scmp.le.s32.totalorder 2, %s19
      // Predicated region
      $region61: #{tpu_custom_call.1} parent=5 // pred_check
        %p3180 = pneg %p3179
      $region62: #{tpu_custom_call.1} parent=5 // pred_check_branch
        %3182 = sbr.rel (%p3180) target = $region64
      $region63: #{tpu_custom_call.1} parent=5 // pred_region
        %s3183 = ssub.s32 %s19, 2
        // Predicated region
        $region65: #{tpu_custom_call.1} parent=63 // pred_check
          %p3184 = pneg %p158
        $region66: #{tpu_custom_call.1} parent=63 // pred_check_branch
          %3186 = sbr.rel (%p3184) target = $region68
        $region67: #{tpu_custom_call.1} parent=63 // pred_region
          %s3187 = sand.u32 %s143, 1
          %s3188 = scalar_lea.sflag [#allocation4], %s3187
          %s3189 = sand.u32 %s143, 1
          %s3190 = smul.addr %s3189, 16
          %s3191 = scalar_lea.vmem [#allocation10], %s3190
          %3193 = dma.done %s3188, 256
        $region68: #{tpu_custom_call.1} parent=63 // pred_fallthru
          _
      $region64: #{tpu_custom_call.1} parent=5 // pred_fallthru
        _
    $region6: #{tpu_custom_call.1} parent=1 // loop_footer
      %s23 = sadd.s32 1, %s19
    $region7: #{tpu_custom_call.1} parent=1 // loop_footer_branch
      %18 = sbr.rel target = $region3
    $region8: #{tpu_custom_call.1} parent=1 // loop_exit
      _
    %3194 = vsyncpa [#allocation3], 1
    %s3195 = scalar_lea.sflag [#allocation3], 1
    %3196 = vsyncpa %s3195, 1
    %3197 = vsyncpa [#allocation6], 1
    %3198 = vsyncpa [#allocation9], 1
    %3199 = vsyncpa [#allocation4], 1
    %s3200 = scalar_lea.sflag [#allocation4], 1
    %3201 = vsyncpa %s3200, 1

</llo_original>
